<compile_context>
chip_gen: v6e
topology: v6e:2x2x1
jax: 0.10.0
libtpu: 0.0.40
codegen_flags: <defaults>
</compile_context>

<pallas_src>
import functools

import jax
import jax.numpy as jnp
from jax import lax
from jax.experimental import pallas as pl
from jax.experimental.pallas import tpu as pltpu

DESCRIPTOR_SIZE = 16                         # descriptor_size in the torch module
LANES = 128
SAMPLES_PER_ROW = LANES // DESCRIPTOR_SIZE   # 8 samples per 128-lane row
MAX_TILE_ROWS = 2048                         # packed rows per grid step (16K samples)

# NOTE: the PyTorch module never sets self.margin (calling it would raise
# AttributeError); margin is therefore surfaced as an explicit parameter.
DEFAULT_MARGIN = 0.01


def _round_up(x, m):
    return ((x + m - 1) // m) * m


def _cdiv(a, b):
    return -(-a // b)


def _num_core_splits():
    """Leading 'parallel' grid axis: 2 only on multi-TensorCore chips."""
    try:
        kind = jax.devices()[0].device_kind.lower()
    except Exception:
        return 1
    if "v7" in kind or "v4" in kind or "v5p" in kind:
        return 2
    return 1


def _triplet_kernel(seg_ref, a_ref, pul_ref, pus_ref, out_ref, *,
                    margin, valid_rows, tile_rows, tiles_per_core):
    """One (tile_rows, 128) tile of packed anchor/puller/pusher samples.

    out_ref is a per-core (1, 2) SMEM block resident across the reduction
    axis: [:, 0] accumulates sum(clamp(diff, 0)), [:, 1] accumulates
    sum(diff_pos).  Rows past `valid_rows` (ragged last tile / logically
    out-of-range tiles of the last core) are masked out, so the inputs never
    need padding.
    """
    c = pl.program_id(0)
    i = pl.program_id(1)

    @pl.when(i == 0)
    def _():
        out_ref[0, 0] = jnp.float32(0.0)
        out_ref[0, 1] = jnp.float32(0.0)

    # Logical (unclamped) first packed-row index of this tile.
    row0 = (c * tiles_per_core + i) * tile_rows
    local = lax.broadcasted_iota(jnp.int32, (tile_rows, 1), 0)
    valid = (row0 + local) < valid_rows               # (tile_rows, 1) row mask

    a = a_ref[...].astype(jnp.float32)
    d_pos = a - pul_ref[...].astype(jnp.float32)
    d_neg = a - pus_ref[...].astype(jnp.float32)
    sq_pos = d_pos * d_pos                            # (tile_rows, 128)
    sq_neg = d_neg * d_neg

    # Per-sample squared distances: (tile_rows, 8) via one small MXU matmul
    # against the resident (128, 8) block-diagonal ones matrix.
    seg = seg_ref[...]
    diff_pos = jnp.dot(sq_pos, seg, preferred_element_type=jnp.float32,
                       precision=lax.Precision.HIGHEST)
    diff_neg = jnp.dot(sq_neg, seg, preferred_element_type=jnp.float32,
                       precision=lax.Precision.HIGHEST)

    # Exact divide (kernel is HBM-bound -> free), matching the reference.
    # Invalid rows may hold garbage (even inf/NaN); rows never mix, and the
    # jnp.where masks select the garbage away before accumulation.
    diff = 1.0 - diff_neg / (diff_pos + margin)
    clamped = jnp.where(valid, jnp.maximum(diff, 0.0), 0.0)

    # Lane-dense positive-distance sum: exact and independent of the MXU.
    row_pos = jnp.where(valid, jnp.sum(sq_pos, axis=1, keepdims=True), 0.0)

    out_ref[0, 0] += jnp.sum(clamped)
    out_ref[0, 1] += jnp.sum(row_pos)


def net_forward(anchor, puller, pusher, margin=DEFAULT_MARGIN,
                max_tile_rows=MAX_TILE_ROWS):
    """Triplet loss forward pass. Inputs: (N, 16) arrays. Returns scalar f32."""
    assert anchor.shape == puller.shape == pusher.shape
    n, d = anchor.shape
    assert d == DESCRIPTOR_SIZE, "descriptor_size must be 16"
    assert n >= 1

    full_rows = n // SAMPLES_PER_ROW
    main_n = full_rows * SAMPLES_PER_ROW
    tail = n - main_n

    sum_t = jnp.float32(0.0)   # running sum(clamp(diff, 0))
    sum_p = jnp.float32(0.0)   # running sum(diff_pos)

    if full_rows > 0:
        def pack(x):
            # Free reshape for a contiguous row-major array: 8 consecutive
            # 16-wide samples share one 128-lane row.  (If N % 8 != 0 the
            # prefix slice may copy once; still far cheaper than padding, and
            # the common aligned case is copy-free.)
            x = x if tail == 0 else x[:main_n]
            return x.reshape(full_rows, LANES)

        a_p, pul_p, pus_p = pack(anchor), pack(puller), pack(pusher)

        splits = _num_core_splits()
        rows_per_core = _cdiv(full_rows, splits)
        tile_rows = _round_up(min(max_tile_rows, rows_per_core), 8)
        total_blocks = _cdiv(full_rows, tile_rows)
        splits = min(splits, total_blocks)
        tiles_per_core = _cdiv(total_blocks, splits)
        last_block = total_blocks - 1

        # Block-diagonal (128, 8) ones matrix: lane l feeds sample col l // 16.
        lane = jnp.arange(LANES, dtype=jnp.int32)[:, None]
        col = jnp.arange(SAMPLES_PER_ROW, dtype=jnp.int32)[None, :]
        seg = (lane // DESCRIPTOR_SIZE == col).astype(jnp.float32)

        kernel = functools.partial(
            _triplet_kernel, margin=float(margin), valid_rows=full_rows,
            tile_rows=tile_rows, tiles_per_core=tiles_per_core)

        # Clamp the block index so a logically out-of-range tile (possible on
        # the last core when splits * tiles_per_core > total_blocks) re-reads
        # the last valid block; its rows are fully masked in the kernel.
        def data_map(c, i):
            return (jnp.minimum(c * tiles_per_core + i, last_block), 0)

        data_spec = pl.BlockSpec((tile_rows, LANES), data_map)
        # Resident constant block (constant index_map -> never re-fetched).
        seg_spec = pl.BlockSpec((LANES, SAMPLES_PER_ROW), lambda c, i: (0, 0))
        # TODO(synk): optionally sweep pipeline_mode=pl.Buffered(3) on the
        # three data specs if a trace shows a DMA bubble at tile boundaries.

        partials = pl.pallas_call(
            kernel,
            out_shape=jax.ShapeDtypeStruct((splits, 2), jnp.float32),
            grid=(splits, tiles_per_core),
            in_specs=[seg_spec, data_spec, data_spec, data_spec],
            out_specs=pl.BlockSpec((1, 2), lambda c, i: (c, 0),
                                   memory_space=pltpu.SMEM),
            compiler_params=pltpu.CompilerParams(
                dimension_semantics=("parallel", "arbitrary")),
        )(seg, a_p, pul_p, pus_p)

        sum_t = sum_t + jnp.sum(partials[:, 0])
        sum_p = sum_p + jnp.sum(partials[:, 1])

    if tail > 0:
        # <8-sample tail: tiny plain-JAX epilogue instead of padding the big
        # arrays just to make N a multiple of the 8-sample lane packing.
        a_t = anchor[main_n:].astype(jnp.float32)
        pul_t = puller[main_n:].astype(jnp.float32)
        pus_t = pusher[main_n:].astype(jnp.float32)
        dp = jnp.sum((a_t - pul_t) ** 2, axis=1)
        dn = jnp.sum((a_t - pus_t) ** 2, axis=1)
        dd = 1.0 - dn / (dp + jnp.float32(margin))
        sum_t = sum_t + jnp.sum(jnp.maximum(dd, 0.0))
        sum_p = sum_p + jnp.sum(dp)

    inv_n = jnp.float32(1.0 / n)
    return sum_t * inv_n + sum_p * inv_n


def net_forward_ref(anchor, puller, pusher, margin=DEFAULT_MARGIN):
    """Pure-JAX reference for verification."""
    diff_pos = jnp.sum((anchor - puller) ** 2, axis=1)
    diff_neg = jnp.sum((anchor - pusher) ** 2, axis=1)
    diff = 1.0 - diff_neg / (diff_pos + margin)
    return jnp.mean(jnp.maximum(diff, 0.0)) + jnp.mean(diff_pos)


if __name__ == "__main__":
    # Case 1: N not a multiple of 8 -> exercises the ragged-tile mask and the
    # plain-JAX tail epilogue.
    N1 = 100
    ka, kp, kn = jax.random.split(jax.random.PRNGKey(0), 3)
    a1 = jax.random.normal(ka, (N1, DESCRIPTOR_SIZE), dtype=jnp.float32)
    p1 = jax.random.normal(kp, (N1, DESCRIPTOR_SIZE), dtype=jnp.float32)
    q1 = jax.random.normal(kn, (N1, DESCRIPTOR_SIZE), dtype=jnp.float32)
    loss1 = jax.jit(net_forward)(a1, p1, q1)
    jax.block_until_ready(loss1)
    ref1 = net_forward_ref(a1, p1, q1)
    assert jnp.allclose(loss1, ref1, rtol=1e-4, atol=1e-5), (loss1, ref1)

    # Case 2: aligned N with a small forced tile -> exercises multi-tile
    # accumulation and the partial (masked) last tile.
    N2 = 1000
    kb, kq, kr = jax.random.split(jax.random.PRNGKey(1), 3)
    a2 = jax.random.normal(kb, (N2, DESCRIPTOR_SIZE), dtype=jnp.float32)
    p2 = jax.random.normal(kq, (N2, DESCRIPTOR_SIZE), dtype=jnp.float32)
    q2 = jax.random.normal(kr, (N2, DESCRIPTOR_SIZE), dtype=jnp.float32)
    loss2 = jax.jit(functools.partial(net_forward, max_tile_rows=64))(a2, p2, q2)
    jax.block_until_ready(loss2)
    ref2 = net_forward_ref(a2, p2, q2)
    assert jnp.allclose(loss2, ref2, rtol=1e-4, atol=1e-5), (loss2, ref2)

    print("KERNEL_OK")
</pallas_src>

<mosaic_0001>
module attributes {stable_mosaic.version = 11 : i64} {
  func.func @_triplet_kernel(%arg0: i32, %arg1: i32, %arg2: memref<128x8xf32, #tpu.memory_space<vmem>>, %arg3: memref<16x128xf32, #tpu.memory_space<vmem>>, %arg4: memref<16x128xf32, #tpu.memory_space<vmem>>, %arg5: memref<16x128xf32, #tpu.memory_space<vmem>>, %arg6: memref<1x2xf32, #tpu.memory_space<smem>>) attributes {dimension_semantics = [#tpu.dimension_semantics<parallel>, #tpu.dimension_semantics<arbitrary>], iteration_bounds = array<i64: 1, 1>, scalar_prefetch = 0 : i64, scratch_operands = 0 : i64, tpu.core_type = #tpu.core_type<tc>, window_params = [{pipeline_mode = #tpu.pipeline_mode<synchronous>, transform_indices = @transform_0, window_bounds = array<i64: 128, 8>}, {transform_indices = @transform_1, window_bounds = array<i64: 16, 128>}, {transform_indices = @transform_2, window_bounds = array<i64: 16, 128>}, {transform_indices = @transform_3, window_bounds = array<i64: 16, 128>}, {transform_indices = @transform_4, window_bounds = array<i64: 1, 2>}]} {
    %c0_i32 = arith.constant 0 : i32
    %0 = arith.cmpi eq, %arg1, %c0_i32 : i32
    %1 = arith.extui %0 : i1 to i32
    %c0_i32_0 = arith.constant 0 : i32
    %2 = arith.cmpi ne, %1, %c0_i32_0 : i32
    scf.if %2 {
      %cst_24 = arith.constant 0.000000e+00 : f32
      %c0_25 = arith.constant 0 : index
      %c0_26 = arith.constant 0 : index
      %50 = memref.load %arg6[%c0_25, %c0_26] : memref<1x2xf32, #tpu.memory_space<smem>>
      memref.store %cst_24, %arg6[%c0_25, %c0_26] : memref<1x2xf32, #tpu.memory_space<smem>>
      %cst_27 = arith.constant 0.000000e+00 : f32
      %c0_28 = arith.constant 0 : index
      %c1_29 = arith.constant 1 : index
      %51 = memref.load %arg6[%c0_28, %c1_29] : memref<1x2xf32, #tpu.memory_space<smem>>
      memref.store %cst_27, %arg6[%c0_28, %c1_29] : memref<1x2xf32, #tpu.memory_space<smem>>
    } else {
    }
    %c1_i32 = arith.constant 1 : i32
    %3 = arith.muli %arg0, %c1_i32 : i32
    %4 = arith.addi %3, %arg1 : i32
    %c16_i32 = arith.constant 16 : i32
    %5 = arith.muli %4, %c16_i32 : i32
    %6 = tpu.iota {dimensions = array<i32: 0>} : vector<16x1xi32>
    %7 = vector.broadcast %5 : i32 to vector<16x1xi32>
    %8 = arith.addi %7, %6 : vector<16x1xi32>
    %c12_i32 = arith.constant 12 : i32
    %9 = vector.broadcast %c12_i32 : i32 to vector<16x1xi32>
    %10 = arith.cmpi slt, %8, %9 : vector<16x1xi32>
    %c0 = arith.constant 0 : index
    %c0_1 = arith.constant 0 : index
    %11 = vector.load %arg3[%c0, %c0_1] : memref<16x128xf32, #tpu.memory_space<vmem>>, vector<16x128xf32>
    %c0_2 = arith.constant 0 : index
    %c0_3 = arith.constant 0 : index
    %12 = vector.load %arg4[%c0_2, %c0_3] : memref<16x128xf32, #tpu.memory_space<vmem>>, vector<16x128xf32>
    %13 = arith.subf %11, %12 : vector<16x128xf32>
    %c0_4 = arith.constant 0 : index
    %c0_5 = arith.constant 0 : index
    %14 = vector.load %arg5[%c0_4, %c0_5] : memref<16x128xf32, #tpu.memory_space<vmem>>, vector<16x128xf32>
    %15 = arith.subf %11, %14 : vector<16x128xf32>
    %16 = arith.mulf %13, %13 : vector<16x128xf32>
    %17 = arith.mulf %15, %15 : vector<16x128xf32>
    %c0_6 = arith.constant 0 : index
    %c0_7 = arith.constant 0 : index
    %18 = vector.load %arg2[%c0_6, %c0_7] : memref<128x8xf32, #tpu.memory_space<vmem>>, vector<128x8xf32>
    %cst = arith.constant dense<0.000000e+00> : vector<16x8xf32>
    %19 = tpu.matmul %16, %18, %cst {dimension_numbers = #tpu.dot_dimension_numbers<[1], [0], [0], [1], [0, 0, 1, 1], [], []>, precision = #tpu.contract_precision<fp32>} : vector<16x128xf32>, vector<128x8xf32>, vector<16x8xf32> -> vector<16x8xf32>
    %cst_8 = arith.constant dense<0.000000e+00> : vector<16x8xf32>
    %20 = tpu.matmul %17, %18, %cst_8 {dimension_numbers = #tpu.dot_dimension_numbers<[1], [0], [0], [1], [0, 0, 1, 1], [], []>, precision = #tpu.contract_precision<fp32>} : vector<16x128xf32>, vector<128x8xf32>, vector<16x8xf32> -> vector<16x8xf32>
    %cst_9 = arith.constant 0.00999999977 : f32
    %21 = vector.broadcast %cst_9 : f32 to vector<16x8xf32>
    %22 = arith.addf %19, %21 : vector<16x8xf32>
    %23 = arith.divf %20, %22 : vector<16x8xf32>
    %cst_10 = arith.constant 1.000000e+00 : f32
    %24 = vector.broadcast %cst_10 : f32 to vector<16x8xf32>
    %25 = arith.subf %24, %23 : vector<16x8xf32>
    %cst_11 = arith.constant 0.000000e+00 : f32
    %26 = vector.broadcast %cst_11 : f32 to vector<16x8xf32>
    %27 = arith.maximumf %25, %26 : vector<16x8xf32>
    %cst_12 = arith.constant 0.000000e+00 : f32
    %28 = vector.shape_cast %10 : vector<16x1xi1> to vector<16x1xi1>
    %29 = vector.broadcast %28 : vector<16x1xi1> to vector<16x8xi1>
    %30 = vector.broadcast %cst_12 : f32 to vector<16x8xf32>
    %31 = arith.select %29, %27, %30 : vector<16x8xi1>, vector<16x8xf32>
    %cst_13 = arith.constant dense<0.000000e+00> : vector<16xf32>
    %32 = vector.multi_reduction <add>, %16, %cst_13 [1] : vector<16x128xf32> to vector<16xf32>
    %33 = vector.shape_cast %32 : vector<16xf32> to vector<16x1xf32>
    %cst_14 = arith.constant 0.000000e+00 : f32
    %34 = vector.broadcast %cst_14 : f32 to vector<16x1xf32>
    %35 = arith.select %10, %33, %34 : vector<16x1xi1>, vector<16x1xf32>
    %c0_15 = arith.constant 0 : index
    %c0_16 = arith.constant 0 : index
    %36 = memref.load %arg6[%c0_15, %c0_16] : memref<1x2xf32, #tpu.memory_space<smem>>
    %37 = vector.shape_cast %31 : vector<16x8xf32> to vector<1x16x8xf32>
    %cst_17 = arith.constant dense<0.000000e+00> : vector<1xf32>
    %38 = vector.multi_reduction <add>, %37, %cst_17 [1, 2] : vector<1x16x8xf32> to vector<1xf32>
    %39 = vector.shape_cast %38 : vector<1xf32> to vector<1x1x1xf32>
    %40 = vector.extract %39[0, 0, 0] : f32 from vector<1x1x1xf32>
    %41 = arith.addf %36, %40 : f32
    %c0_18 = arith.constant 0 : index
    %c0_19 = arith.constant 0 : index
    %42 = memref.load %arg6[%c0_18, %c0_19] : memref<1x2xf32, #tpu.memory_space<smem>>
    memref.store %41, %arg6[%c0_18, %c0_19] : memref<1x2xf32, #tpu.memory_space<smem>>
    %c0_20 = arith.constant 0 : index
    %c1 = arith.constant 1 : index
    %43 = memref.load %arg6[%c0_20, %c1] : memref<1x2xf32, #tpu.memory_space<smem>>
    %44 = vector.shape_cast %35 : vector<16x1xf32> to vector<1x16x1xf32>
    %cst_21 = arith.constant dense<0.000000e+00> : vector<1xf32>
    %45 = vector.multi_reduction <add>, %44, %cst_21 [1, 2] : vector<1x16x1xf32> to vector<1xf32>
    %46 = vector.shape_cast %45 : vector<1xf32> to vector<1x1x1xf32>
    %47 = vector.extract %46[0, 0, 0] : f32 from vector<1x1x1xf32>
    %48 = arith.addf %43, %47 : f32
    %c0_22 = arith.constant 0 : index
    %c1_23 = arith.constant 1 : index
    %49 = memref.load %arg6[%c0_22, %c1_23] : memref<1x2xf32, #tpu.memory_space<smem>>
    memref.store %48, %arg6[%c0_22, %c1_23] : memref<1x2xf32, #tpu.memory_space<smem>>
    return
  }
  func.func @transform_0(%arg0: i32, %arg1: i32) -> (i32, i32) {
    %c0_i32 = arith.constant 0 : i32
    %c0_i32_0 = arith.constant 0 : i32
    %c0_i32_1 = arith.constant 0 : i32
    return %c0_i32, %c0_i32_0 : i32, i32
  }
  func.func @transform_1(%arg0: i32, %arg1: i32) -> (i32, i32) {
    %c1_i32 = arith.constant 1 : i32
    %0 = arith.muli %arg0, %c1_i32 : i32
    %1 = arith.addi %0, %arg1 : i32
    %c0_i32 = arith.constant 0 : i32
    %2 = arith.minsi %1, %c0_i32 : i32
    %c0_i32_0 = arith.constant 0 : i32
    %c0_i32_1 = arith.constant 0 : i32
    return %2, %c0_i32_0 : i32, i32
  }
  func.func @transform_2(%arg0: i32, %arg1: i32) -> (i32, i32) {
    %c1_i32 = arith.constant 1 : i32
    %0 = arith.muli %arg0, %c1_i32 : i32
    %1 = arith.addi %0, %arg1 : i32
    %c0_i32 = arith.constant 0 : i32
    %2 = arith.minsi %1, %c0_i32 : i32
    %c0_i32_0 = arith.constant 0 : i32
    %c0_i32_1 = arith.constant 0 : i32
    return %2, %c0_i32_0 : i32, i32
  }
  func.func @transform_3(%arg0: i32, %arg1: i32) -> (i32, i32) {
    %c1_i32 = arith.constant 1 : i32
    %0 = arith.muli %arg0, %c1_i32 : i32
    %1 = arith.addi %0, %arg1 : i32
    %c0_i32 = arith.constant 0 : i32
    %2 = arith.minsi %1, %c0_i32 : i32
    %c0_i32_0 = arith.constant 0 : i32
    %c0_i32_1 = arith.constant 0 : i32
    return %2, %c0_i32_0 : i32, i32
  }
  func.func @transform_4(%arg0: i32, %arg1: i32) -> (i32, i32) {
    %c0_i32 = arith.constant 0 : i32
    %c0_i32_0 = arith.constant 0 : i32
    return %arg0, %c0_i32 : i32, i32
  }
}

</mosaic_0001>

<llo_original>
// kernel: net_forward.1
$region0: #{net_forward.1}
  #allocation0 [shape = 'u32[]', space=smem, size = 0x4, offset = 0x4, fixed_abs, tag = 'smem constant byte address 0x4 - core index']
  #allocation1 [shape = 'u32[144,128]{1,0:T(1,128)}', space=vmem, size = 0x12000, scoped, tag = 'internal scratch']
  %s0 = inlined_call_operand.vmem [shape: f32[128,8], index: 0, kind: input, shape index: {}]
  %s1 = inlined_call_operand.vmem [shape: f32[12,128], index: 1, kind: input, shape index: {}]
  %s2 = inlined_call_operand.vmem [shape: f32[12,128], index: 2, kind: input, shape index: {}]
  %s3 = inlined_call_operand.vmem [shape: f32[12,128], index: 3, kind: input, shape index: {}]
  %s4 = inlined_call_operand.vmem [shape: f32[1,2], index: 4, kind: output, shape index: {}]
  %s5 = sld [smem:[#allocation0]]
  $region30: #{net_forward.1} parent=0
    _
  %s7 = ssub.s32 1, %s5
  %s8 = scalar_select 0, %s7, %s5
  $region1: #{net_forward.1} parent=0
    #allocation2 [shape = 'u8[512]{0}', space=smem, size = 0x200, scoped, tag = 'output window, operand 0, single buffered']
    #allocation3 [shape = 's32[1]{0}', space=sflag, size = 0x4, scoped, tag = 'scoped memory for net_forward.1']
    %9 = vsyncpa [#allocation3], 0
    // Predicated region
    $region2: #{net_forward.1} parent=1 // pred_check
      _
    $region3: #{net_forward.1} parent=1 // pred_check_branch
      %11 = sbr.rel (0) target = $region5
    $region4: #{net_forward.1} parent=1 // pred_region
      _
    $region5: #{net_forward.1} parent=1 // pred_fallthru
      _
    // Predicated region
    $region6: #{net_forward.1} parent=1 // pred_check
      _
    $region7: #{net_forward.1} parent=1 // pred_check_branch
      %13 = sbr.rel (0) target = $region9
    $region8: #{net_forward.1} parent=1 // pred_region
      %s14 = sadd.s32 0, 0
      %p15 = scmp.lt.s32.totalorder %s14, 0
      %s16 = scalar_select %p15, %s14, 0
      %s17 = smul.u32 2, %s16
      %p18 = scmp.lt.s32.totalorder %s17, 1
      %s19 = scalar_select %p18, %s17, 1
      %s20 = smul.addr %s19, 8
      %s21 = scalar_lea.vmem %s1, %s20
      %s22 = sadd.s32 0, 0
      %p23 = scmp.lt.s32.totalorder %s22, 0
      %s24 = scalar_select %p23, %s22, 0
      %s25 = smul.u32 2, %s24
    $region9: #{net_forward.1} parent=1 // pred_fallthru
      _
    // Predicated region
    $region10: #{net_forward.1} parent=1 // pred_check
      _
    $region11: #{net_forward.1} parent=1 // pred_check_branch
      %27 = sbr.rel (0) target = $region13
    $region12: #{net_forward.1} parent=1 // pred_region
      %s28 = sadd.s32 0, 0
      %p29 = scmp.lt.s32.totalorder %s28, 0
      %s30 = scalar_select %p29, %s28, 0
      %s31 = smul.u32 2, %s30
      %p32 = scmp.lt.s32.totalorder %s31, 1
      %s33 = scalar_select %p32, %s31, 1
      %s34 = smul.addr %s33, 8
      %s35 = scalar_lea.vmem %s2, %s34
      %s36 = sadd.s32 0, 0
      %p37 = scmp.lt.s32.totalorder %s36, 0
      %s38 = scalar_select %p37, %s36, 0
      %s39 = smul.u32 2, %s38
    $region13: #{net_forward.1} parent=1 // pred_fallthru
      _
    // Predicated region
    $region14: #{net_forward.1} parent=1 // pred_check
      _
    $region15: #{net_forward.1} parent=1 // pred_check_branch
      %41 = sbr.rel (0) target = $region17
    $region16: #{net_forward.1} parent=1 // pred_region
      %s42 = sadd.s32 0, 0
      %p43 = scmp.lt.s32.totalorder %s42, 0
      %s44 = scalar_select %p43, %s42, 0
      %s45 = smul.u32 2, %s44
      %p46 = scmp.lt.s32.totalorder %s45, 1
      %s47 = scalar_select %p46, %s45, 1
      %s48 = smul.addr %s47, 8
      %s49 = scalar_lea.vmem %s3, %s48
      %s50 = sadd.s32 0, 0
      %p51 = scmp.lt.s32.totalorder %s50, 0
      %s52 = scalar_select %p51, %s50, 0
      %s53 = smul.u32 2, %s52
    $region17: #{net_forward.1} parent=1 // pred_fallthru
      _
    %s54 = sadd.s32 0, 0
    %p55 = scmp.lt.s32.totalorder %s54, 0
    %s56 = scalar_select %p55, %s54, 0
    %s57 = smul.u32 2, %s56
    %p58 = scmp.lt.s32.totalorder %s57, 1
    %s59 = scalar_select %p58, %s57, 1
    %s60 = smul.addr %s59, 8
    %s61 = scalar_lea.vmem %s1, %s60
    %s62 = sadd.s32 0, 0
    %p63 = scmp.lt.s32.totalorder %s62, 0
    %s64 = scalar_select %p63, %s62, 0
    %s65 = smul.u32 2, %s64
    %p66 = scmp.lt.s32.totalorder %s65, 1
    %s67 = scalar_select %p66, %s65, 1
    %s68 = smul.addr %s67, 8
    %s69 = scalar_lea.vmem %s2, %s68
    %s70 = sadd.s32 0, 0
    %p71 = scmp.lt.s32.totalorder %s70, 0
    %s72 = scalar_select %p71, %s70, 0
    %s73 = smul.u32 2, %s72
    %p74 = scmp.lt.s32.totalorder %s73, 1
    %s75 = scalar_select %p74, %s73, 1
    %s76 = smul.addr %s75, 8
    %s77 = scalar_lea.vmem %s3, %s76
    %s78 = sadd.s32 0, 0
    %p79 = scmp.lt.s32.totalorder %s78, 0
    %s80 = scalar_select %p79, %s78, 0
    %s81 = smul.u32 2, %s80
    %p82 = scmp.lt.s32.totalorder %s81, 1
    %s83 = scalar_select %p82, %s81, 1
    %s84 = smul.addr %s83, 8
    %s85 = scalar_lea.vmem %s1, %s84
    %s86 = sadd.s32 0, 0
    %p87 = scmp.lt.s32.totalorder %s86, 0
    %s88 = scalar_select %p87, %s86, 0
    %s89 = smul.u32 2, %s88
    %s90 = sadd.s32 0, 0
    %p91 = scmp.lt.s32.totalorder %s90, 0
    %s92 = scalar_select %p91, %s90, 0
    %s93 = smul.u32 2, %s92
    %p94 = scmp.lt.s32.totalorder %s93, 1
    %s95 = scalar_select %p94, %s93, 1
    %s96 = smul.addr %s95, 8
    %s97 = scalar_lea.vmem %s2, %s96
    %s98 = sadd.s32 0, 0
    %p99 = scmp.lt.s32.totalorder %s98, 0
    %s100 = scalar_select %p99, %s98, 0
    %s101 = smul.u32 2, %s100
    %s102 = sadd.s32 0, 0
    %p103 = scmp.lt.s32.totalorder %s102, 0
    %s104 = scalar_select %p103, %s102, 0
    %s105 = smul.u32 2, %s104
    %p106 = scmp.lt.s32.totalorder %s105, 1
    %s107 = scalar_select %p106, %s105, 1
    %s108 = smul.addr %s107, 8
    %s109 = scalar_lea.vmem %s3, %s108
    %s110 = sadd.s32 0, 0
    %p111 = scmp.lt.s32.totalorder %s110, 0
    %s112 = scalar_select %p111, %s110, 0
    %s113 = smul.u32 2, %s112
    %p114 = scmp.eq.s32.totalorder 0, 0
    // Predicated region
    $region18: #{net_forward.1} parent=1 // pred_check
      %p115 = pneg %p114
    $region19: #{net_forward.1} parent=1 // pred_check_branch
      %117 = sbr.rel (%p115) target = $region21
    $region20: #{net_forward.1} parent=1 // pred_region
      %s118 = scalar_lea.smem [#allocation2], 0
      %119 = sst [smem:[%s118]] 0.0
      %s120 = scalar_lea.smem [#allocation2], 1
      %121 = sst [smem:[%s120]] 0.0
    $region21: #{net_forward.1} parent=1 // pred_fallthru
      _
    %s122 = sadd.s32 0, 0
    %s123 = smul.u32 %s122, 16
    %v124 = vlaneseq
    %v125 = vshrl.u32 %v124, 7
    %v126 = vadd.s32 %v125, 8
    %v127 = vstv %s123
    %v128 = vadd.s32 %v127, %v125
    %v129 = vadd.s32 %v127, %v126
    %vm130 = vcmp.lt.s32.totalorder %v128, 12
    %vm131 = vcmp.lt.s32.totalorder %v129, 12
    %v132 = vld [vmem:[%s85] sm:$0xff]
    %v133 = vld [vmem:[%s85 + $0x8] sm:$0xff]
    %v134 = vld [vmem:[%s97] sm:$0xff]
    %v135 = vld [vmem:[%s97 + $0x8] sm:$0xff]
    %v136 = vsub.f32 %v132, %v134
    %v137 = vsub.f32 %v133, %v135
    %v138 = vld [vmem:[%s109] sm:$0xff]
    %v139 = vld [vmem:[%s109 + $0x8] sm:$0xff]
    %v140 = vsub.f32 %v132, %v138
    %v141 = vsub.f32 %v133, %v139
    %v142 = vmul.f32 %v136, %v136
    %v143 = vmul.f32 %v137, %v137
    %v144 = vmul.f32 %v140, %v140
    %v145 = vmul.f32 %v141, %v141
    %v146 = vld [vmem:[%s0] sm:$0xff]
    %v147 = vld [vmem:[%s0 + $0x8] sm:$0xff]
    %v148 = vld [vmem:[%s0 + $0x10] sm:$0xff]
    %v149 = vld [vmem:[%s0 + $0x18] sm:$0xff]
    %v150 = vld [vmem:[%s0 + $0x20] sm:$0xff]
    %v151 = vld [vmem:[%s0 + $0x28] sm:$0xff]
    %v152 = vld [vmem:[%s0 + $0x30] sm:$0xff]
    %v153 = vld [vmem:[%s0 + $0x38] sm:$0xff]
    %v154 = vld [vmem:[%s0 + $0x40] sm:$0xff]
    %v155 = vld [vmem:[%s0 + $0x48] sm:$0xff]
    %v156 = vld [vmem:[%s0 + $0x50] sm:$0xff]
    %v157 = vld [vmem:[%s0 + $0x58] sm:$0xff]
    %v158 = vld [vmem:[%s0 + $0x60] sm:$0xff]
    %v159 = vld [vmem:[%s0 + $0x68] sm:$0xff]
    %v160 = vld [vmem:[%s0 + $0x70] sm:$0xff]
    %v161 = vld [vmem:[%s0 + $0x78] sm:$0xff]
    %162 = vmatprep.subr.mxu0 0.0
    %v163 = vand.u32 %v161, 4294901760
    %164 = vmatpush1.msra.mxu0 %v163
    %165 = vmatprep.subr.mxu0 0.0
    %v166 = vand.u32 %v160, 4294901760
    %167 = vmatpush1.msra.mxu0 %v166
    %168 = vmatprep.subr.mxu0 0.0
    %v169 = vand.u32 %v159, 4294901760
    %170 = vmatpush1.msra.mxu0 %v169
    %171 = vmatprep.subr.mxu0 0.0
    %v172 = vand.u32 %v158, 4294901760
    %173 = vmatpush1.msra.mxu0 %v172
    %174 = vmatprep.subr.mxu0 0.0
    %v175 = vand.u32 %v157, 4294901760
    %176 = vmatpush1.msra.mxu0 %v175
    %177 = vmatprep.subr.mxu0 0.0
    %v178 = vand.u32 %v156, 4294901760
    %179 = vmatpush1.msra.mxu0 %v178
    %180 = vmatprep.subr.mxu0 0.0
    %v181 = vand.u32 %v155, 4294901760
    %182 = vmatpush1.msra.mxu0 %v181
    %183 = vmatprep.subr.mxu0 0.0
    %v184 = vand.u32 %v154, 4294901760
    %185 = vmatpush1.msra.mxu0 %v184
    %186 = vmatprep.subr.mxu0 0.0
    %v187 = vand.u32 %v153, 4294901760
    %188 = vmatpush1.msra.mxu0 %v187
    %189 = vmatprep.subr.mxu0 0.0
    %v190 = vand.u32 %v152, 4294901760
    %191 = vmatpush1.msra.mxu0 %v190
    %192 = vmatprep.subr.mxu0 0.0
    %v193 = vand.u32 %v151, 4294901760
    %194 = vmatpush1.msra.mxu0 %v193
    %195 = vmatprep.subr.mxu0 0.0
    %v196 = vand.u32 %v150, 4294901760
    %197 = vmatpush1.msra.mxu0 %v196
    %198 = vmatprep.subr.mxu0 0.0
    %v199 = vand.u32 %v149, 4294901760
    %200 = vmatpush1.msra.mxu0 %v199
    %201 = vmatprep.subr.mxu0 0.0
    %v202 = vand.u32 %v148, 4294901760
    %203 = vmatpush1.msra.mxu0 %v202
    %204 = vmatprep.subr.mxu0 0.0
    %v205 = vand.u32 %v147, 4294901760
    %206 = vmatpush1.msra.mxu0 %v205
    %207 = vmatprep.subr.mxu0 0.0
    %v208 = vand.u32 %v146, 4294901760
    %209 = vmatpush1.msra.mxu0 %v208
    %210 = vmatprep.subr.mxu0 0.0
    %211 = vmatpush2.msra.mxu0 0.0
    %212 = vmatprep.subr.mxu0 0.0
    %213 = vmatpush2.msra.mxu0 0.0
    %214 = vmatprep.subr.mxu0 0.0
    %215 = vmatpush2.msra.mxu0 0.0
    %216 = vmatprep.subr.mxu0 0.0
    %217 = vmatpush2.msra.mxu0 0.0
    %218 = vmatprep.subr.mxu0 0.0
    %219 = vmatpush2.msra.mxu0 0.0
    %220 = vmatprep.subr.mxu0 0.0
    %221 = vmatpush2.msra.mxu0 0.0
    %222 = vmatprep.subr.mxu0 0.0
    %223 = vmatpush2.msra.mxu0 0.0
    %224 = vmatprep.subr.mxu0 0.0
    %225 = vmatpush2.msra.mxu0 0.0
    %226 = vmatprep.subr.mxu0 0.0
    %227 = vmatpush2.msra.mxu0 0.0
    %228 = vmatprep.subr.mxu0 0.0
    %229 = vmatpush2.msra.mxu0 0.0
    %230 = vmatprep.subr.mxu0 0.0
    %231 = vmatpush2.msra.mxu0 0.0
    %232 = vmatprep.subr.mxu0 0.0
    %233 = vmatpush2.msra.mxu0 0.0
    %234 = vmatprep.subr.mxu0 0.0
    %235 = vmatpush2.msra.mxu0 0.0
    %236 = vmatprep.subr.mxu0 0.0
    %237 = vmatpush2.msra.mxu0 0.0
    %238 = vmatprep.subr.mxu0 0.0
    %239 = vmatpush2.msra.mxu0 0.0
    %240 = vmatprep.subr.mxu0 0.0
    %241 = vmatpush2.msra.mxu0 0.0
    %242 = vmatprep.mubr.f32.mxu0 0.0
    %v243 = vand.u32 %v144, 4294901760
    %v244 = vsub.f32 %v144, %v243
    %v245 = vand.u32 %v244, 4294901760
    %v246 = vsub.f32 %v244, %v245
    %v247 = vand.u32 %v246, 4294901760
    %248 = vmatmul.mubr.f32.gmra.mxu0 %v247
    %v249 = vpop.f32.mrf.mxu0
    %v250 = vadd.f32 0.0, %v249
    %v251 = vpop.f32.mrf.mxu0
    %252 = vmatprep.mubr.f32.mxu0 0.0
    %v253 = vand.u32 %v145, 4294901760
    %v254 = vsub.f32 %v145, %v253
    %v255 = vand.u32 %v254, 4294901760
    %v256 = vsub.f32 %v254, %v255
    %v257 = vand.u32 %v256, 4294901760
    %258 = vmatmul.mubr.f32.gmra.mxu0 %v257
    %v259 = vpop.f32.mrf.mxu0
    %v260 = vadd.f32 0.0, %v259
    %v261 = vpop.f32.mrf.mxu0
    %262 = vdwg.mxu0
    %263 = vmatprep.subr.mxu0 0.0
    %v264 = vand.u32 %v161, 4294901760
    %v265 = vsub.f32 %v161, %v264
    %v266 = vand.u32 %v265, 4294901760
    %v267 = vsub.f32 %v265, %v266
    %v268 = vand.u32 %v267, 4294901760
    %269 = vmatpush1.msra.mxu0 %v268
    %270 = vmatprep.subr.mxu0 0.0
    %v271 = vand.u32 %v160, 4294901760
    %v272 = vsub.f32 %v160, %v271
    %v273 = vand.u32 %v272, 4294901760
    %v274 = vsub.f32 %v272, %v273
    %v275 = vand.u32 %v274, 4294901760
    %276 = vmatpush1.msra.mxu0 %v275
    %277 = vmatprep.subr.mxu0 0.0
    %v278 = vand.u32 %v159, 4294901760
    %v279 = vsub.f32 %v159, %v278
    %v280 = vand.u32 %v279, 4294901760
    %v281 = vsub.f32 %v279, %v280
    %v282 = vand.u32 %v281, 4294901760
    %283 = vmatpush1.msra.mxu0 %v282
    %284 = vmatprep.subr.mxu0 0.0
    %v285 = vand.u32 %v158, 4294901760
    %v286 = vsub.f32 %v158, %v285
    %v287 = vand.u32 %v286, 4294901760
    %v288 = vsub.f32 %v286, %v287
    %v289 = vand.u32 %v288, 4294901760
    %290 = vmatpush1.msra.mxu0 %v289
    %291 = vmatprep.subr.mxu0 0.0
    %v292 = vand.u32 %v157, 4294901760
    %v293 = vsub.f32 %v157, %v292
    %v294 = vand.u32 %v293, 4294901760
    %v295 = vsub.f32 %v293, %v294
    %v296 = vand.u32 %v295, 4294901760
    %297 = vmatpush1.msra.mxu0 %v296
    %298 = vmatprep.subr.mxu0 0.0
    %v299 = vand.u32 %v156, 4294901760
    %v300 = vsub.f32 %v156, %v299
    %v301 = vand.u32 %v300, 4294901760
    %v302 = vsub.f32 %v300, %v301
    %v303 = vand.u32 %v302, 4294901760
    %304 = vmatpush1.msra.mxu0 %v303
    %305 = vmatprep.subr.mxu0 0.0
    %v306 = vand.u32 %v155, 4294901760
    %v307 = vsub.f32 %v155, %v306
    %v308 = vand.u32 %v307, 4294901760
    %v309 = vsub.f32 %v307, %v308
    %v310 = vand.u32 %v309, 4294901760
    %311 = vmatpush1.msra.mxu0 %v310
    %312 = vmatprep.subr.mxu0 0.0
    %v313 = vand.u32 %v154, 4294901760
    %v314 = vsub.f32 %v154, %v313
    %v315 = vand.u32 %v314, 4294901760
    %v316 = vsub.f32 %v314, %v315
    %v317 = vand.u32 %v316, 4294901760
    %318 = vmatpush1.msra.mxu0 %v317
    %319 = vmatprep.subr.mxu0 0.0
    %v320 = vand.u32 %v153, 4294901760
    %v321 = vsub.f32 %v153, %v320
    %v322 = vand.u32 %v321, 4294901760
    %v323 = vsub.f32 %v321, %v322
    %v324 = vand.u32 %v323, 4294901760
    %325 = vmatpush1.msra.mxu0 %v324
    %326 = vmatprep.subr.mxu0 0.0
    %v327 = vand.u32 %v152, 4294901760
    %v328 = vsub.f32 %v152, %v327
    %v329 = vand.u32 %v328, 4294901760
    %v330 = vsub.f32 %v328, %v329
    %v331 = vand.u32 %v330, 4294901760
    %332 = vmatpush1.msra.mxu0 %v331
    %333 = vmatprep.subr.mxu0 0.0
    %v334 = vand.u32 %v151, 4294901760
    %v335 = vsub.f32 %v151, %v334
    %v336 = vand.u32 %v335, 4294901760
    %v337 = vsub.f32 %v335, %v336
    %v338 = vand.u32 %v337, 4294901760
    %339 = vmatpush1.msra.mxu0 %v338
    %340 = vmatprep.subr.mxu0 0.0
    %v341 = vand.u32 %v150, 4294901760
    %v342 = vsub.f32 %v150, %v341
    %v343 = vand.u32 %v342, 4294901760
    %v344 = vsub.f32 %v342, %v343
    %v345 = vand.u32 %v344, 4294901760
    %346 = vmatpush1.msra.mxu0 %v345
    %347 = vmatprep.subr.mxu0 0.0
    %v348 = vand.u32 %v149, 4294901760
    %v349 = vsub.f32 %v149, %v348
    %v350 = vand.u32 %v349, 4294901760
    %v351 = vsub.f32 %v349, %v350
    %v352 = vand.u32 %v351, 4294901760
    %353 = vmatpush1.msra.mxu0 %v352
    %354 = vmatprep.subr.mxu0 0.0
    %v355 = vand.u32 %v148, 4294901760
    %v356 = vsub.f32 %v148, %v355
    %v357 = vand.u32 %v356, 4294901760
    %v358 = vsub.f32 %v356, %v357
    %v359 = vand.u32 %v358, 4294901760
    %360 = vmatpush1.msra.mxu0 %v359
    %361 = vmatprep.subr.mxu0 0.0
    %v362 = vand.u32 %v147, 4294901760
    %v363 = vsub.f32 %v147, %v362
    %v364 = vand.u32 %v363, 4294901760
    %v365 = vsub.f32 %v363, %v364
    %v366 = vand.u32 %v365, 4294901760
    %367 = vmatpush1.msra.mxu0 %v366
    %368 = vmatprep.subr.mxu0 0.0
    %v369 = vand.u32 %v146, 4294901760
    %v370 = vsub.f32 %v146, %v369
    %v371 = vand.u32 %v370, 4294901760
    %v372 = vsub.f32 %v370, %v371
    %v373 = vand.u32 %v372, 4294901760
    %374 = vmatpush1.msra.mxu0 %v373
    %375 = vmatprep.subr.mxu0 0.0
    %376 = vmatpush2.msra.mxu0 0.0
    %377 = vmatprep.subr.mxu0 0.0
    %378 = vmatpush2.msra.mxu0 0.0
    %379 = vmatprep.subr.mxu0 0.0
    %380 = vmatpush2.msra.mxu0 0.0
    %381 = vmatprep.subr.mxu0 0.0
    %382 = vmatpush2.msra.mxu0 0.0
    %383 = vmatprep.subr.mxu0 0.0
    %384 = vmatpush2.msra.mxu0 0.0
    %385 = vmatprep.subr.mxu0 0.0
    %386 = vmatpush2.msra.mxu0 0.0
    %387 = vmatprep.subr.mxu0 0.0
    %388 = vmatpush2.msra.mxu0 0.0
    %389 = vmatprep.subr.mxu0 0.0
    %390 = vmatpush2.msra.mxu0 0.0
    %391 = vmatprep.subr.mxu0 0.0
    %392 = vmatpush2.msra.mxu0 0.0
    %393 = vmatprep.subr.mxu0 0.0
    %394 = vmatpush2.msra.mxu0 0.0
    %395 = vmatprep.subr.mxu0 0.0
    %396 = vmatpush2.msra.mxu0 0.0
    %397 = vmatprep.subr.mxu0 0.0
    %398 = vmatpush2.msra.mxu0 0.0
    %399 = vmatprep.subr.mxu0 0.0
    %400 = vmatpush2.msra.mxu0 0.0
    %401 = vmatprep.subr.mxu0 0.0
    %402 = vmatpush2.msra.mxu0 0.0
    %403 = vmatprep.subr.mxu0 0.0
    %404 = vmatpush2.msra.mxu0 0.0
    %405 = vmatprep.subr.mxu0 0.0
    %406 = vmatpush2.msra.mxu0 0.0
    %407 = vmatprep.mubr.f32.mxu0 0.0
    %v408 = vand.u32 %v144, 4294901760
    %409 = vmatmul.mubr.f32.gmra.mxu0 %v408
    %v410 = vpop.f32.mrf.mxu0
    %v411 = vadd.f32 %v250, %v410
    %v412 = vpop.f32.mrf.mxu0
    %413 = vmatprep.mubr.f32.mxu0 0.0
    %v414 = vand.u32 %v145, 4294901760
    %415 = vmatmul.mubr.f32.gmra.mxu0 %v414
    %v416 = vpop.f32.mrf.mxu0
    %v417 = vadd.f32 %v260, %v416
    %v418 = vpop.f32.mrf.mxu0
    %419 = vdwg.mxu0
    %420 = vmatprep.subr.mxu0 0.0
    %v421 = vand.u32 %v161, 4294901760
    %v422 = vsub.f32 %v161, %v421
    %423 = vmatpush1.msra.mxu0 %v422
    %424 = vmatprep.subr.mxu0 0.0
    %v425 = vand.u32 %v160, 4294901760
    %v426 = vsub.f32 %v160, %v425
    %427 = vmatpush1.msra.mxu0 %v426
    %428 = vmatprep.subr.mxu0 0.0
    %v429 = vand.u32 %v159, 4294901760
    %v430 = vsub.f32 %v159, %v429
    %431 = vmatpush1.msra.mxu0 %v430
    %432 = vmatprep.subr.mxu0 0.0
    %v433 = vand.u32 %v158, 4294901760
    %v434 = vsub.f32 %v158, %v433
    %435 = vmatpush1.msra.mxu0 %v434
    %436 = vmatprep.subr.mxu0 0.0
    %v437 = vand.u32 %v157, 4294901760
    %v438 = vsub.f32 %v157, %v437
    %439 = vmatpush1.msra.mxu0 %v438
    %440 = vmatprep.subr.mxu0 0.0
    %v441 = vand.u32 %v156, 4294901760
    %v442 = vsub.f32 %v156, %v441
    %443 = vmatpush1.msra.mxu0 %v442
    %444 = vmatprep.subr.mxu0 0.0
    %v445 = vand.u32 %v155, 4294901760
    %v446 = vsub.f32 %v155, %v445
    %447 = vmatpush1.msra.mxu0 %v446
    %448 = vmatprep.subr.mxu0 0.0
    %v449 = vand.u32 %v154, 4294901760
    %v450 = vsub.f32 %v154, %v449
    %451 = vmatpush1.msra.mxu0 %v450
    %452 = vmatprep.subr.mxu0 0.0
    %v453 = vand.u32 %v153, 4294901760
    %v454 = vsub.f32 %v153, %v453
    %455 = vmatpush1.msra.mxu0 %v454
    %456 = vmatprep.subr.mxu0 0.0
    %v457 = vand.u32 %v152, 4294901760
    %v458 = vsub.f32 %v152, %v457
    %459 = vmatpush1.msra.mxu0 %v458
    %460 = vmatprep.subr.mxu0 0.0
    %v461 = vand.u32 %v151, 4294901760
    %v462 = vsub.f32 %v151, %v461
    %463 = vmatpush1.msra.mxu0 %v462
    %464 = vmatprep.subr.mxu0 0.0
    %v465 = vand.u32 %v150, 4294901760
    %v466 = vsub.f32 %v150, %v465
    %467 = vmatpush1.msra.mxu0 %v466
    %468 = vmatprep.subr.mxu0 0.0
    %v469 = vand.u32 %v149, 4294901760
    %v470 = vsub.f32 %v149, %v469
    %471 = vmatpush1.msra.mxu0 %v470
    %472 = vmatprep.subr.mxu0 0.0
    %v473 = vand.u32 %v148, 4294901760
    %v474 = vsub.f32 %v148, %v473
    %475 = vmatpush1.msra.mxu0 %v474
    %476 = vmatprep.subr.mxu0 0.0
    %v477 = vand.u32 %v147, 4294901760
    %v478 = vsub.f32 %v147, %v477
    %479 = vmatpush1.msra.mxu0 %v478
    %480 = vmatprep.subr.mxu0 0.0
    %v481 = vand.u32 %v146, 4294901760
    %v482 = vsub.f32 %v146, %v481
    %483 = vmatpush1.msra.mxu0 %v482
    %484 = vmatprep.subr.mxu0 0.0
    %485 = vmatpush2.msra.mxu0 0.0
    %486 = vmatprep.subr.mxu0 0.0
    %487 = vmatpush2.msra.mxu0 0.0
    %488 = vmatprep.subr.mxu0 0.0
    %489 = vmatpush2.msra.mxu0 0.0
    %490 = vmatprep.subr.mxu0 0.0
    %491 = vmatpush2.msra.mxu0 0.0
    %492 = vmatprep.subr.mxu0 0.0
    %493 = vmatpush2.msra.mxu0 0.0
    %494 = vmatprep.subr.mxu0 0.0
    %495 = vmatpush2.msra.mxu0 0.0
    %496 = vmatprep.subr.mxu0 0.0
    %497 = vmatpush2.msra.mxu0 0.0
    %498 = vmatprep.subr.mxu0 0.0
    %499 = vmatpush2.msra.mxu0 0.0
    %500 = vmatprep.subr.mxu0 0.0
    %501 = vmatpush2.msra.mxu0 0.0
    %502 = vmatprep.subr.mxu0 0.0
    %503 = vmatpush2.msra.mxu0 0.0
    %504 = vmatprep.subr.mxu0 0.0
    %505 = vmatpush2.msra.mxu0 0.0
    %506 = vmatprep.subr.mxu0 0.0
    %507 = vmatpush2.msra.mxu0 0.0
    %508 = vmatprep.subr.mxu0 0.0
    %509 = vmatpush2.msra.mxu0 0.0
    %510 = vmatprep.subr.mxu0 0.0
    %511 = vmatpush2.msra.mxu0 0.0
    %512 = vmatprep.subr.mxu0 0.0
    %513 = vmatpush2.msra.mxu0 0.0
    %514 = vmatprep.subr.mxu0 0.0
    %515 = vmatpush2.msra.mxu0 0.0
    %516 = vmatprep.mubr.f32.mxu0 0.0
    %v517 = vand.u32 %v144, 4294901760
    %v518 = vsub.f32 %v144, %v517
    %519 = vmatmul.mubr.f32.gmra.mxu0 %v518
    %v520 = vpop.f32.mrf.mxu0
    %v521 = vadd.f32 %v411, %v520
    %v522 = vpop.f32.mrf.mxu0
    %523 = vmatprep.mubr.f32.mxu0 0.0
    %v524 = vand.u32 %v145, 4294901760
    %v525 = vsub.f32 %v145, %v524
    %526 = vmatmul.mubr.f32.gmra.mxu0 %v525
    %v527 = vpop.f32.mrf.mxu0
    %v528 = vadd.f32 %v417, %v527
    %v529 = vpop.f32.mrf.mxu0
    %530 = vdwg.mxu0
    %531 = vmatprep.subr.mxu0 0.0
    %v532 = vand.u32 %v161, 4294901760
    %533 = vmatpush1.msra.mxu0 %v532
    %534 = vmatprep.subr.mxu0 0.0
    %v535 = vand.u32 %v160, 4294901760
    %536 = vmatpush1.msra.mxu0 %v535
    %537 = vmatprep.subr.mxu0 0.0
    %v538 = vand.u32 %v159, 4294901760
    %539 = vmatpush1.msra.mxu0 %v538
    %540 = vmatprep.subr.mxu0 0.0
    %v541 = vand.u32 %v158, 4294901760
    %542 = vmatpush1.msra.mxu0 %v541
    %543 = vmatprep.subr.mxu0 0.0
    %v544 = vand.u32 %v157, 4294901760
    %545 = vmatpush1.msra.mxu0 %v544
    %546 = vmatprep.subr.mxu0 0.0
    %v547 = vand.u32 %v156, 4294901760
    %548 = vmatpush1.msra.mxu0 %v547
    %549 = vmatprep.subr.mxu0 0.0
    %v550 = vand.u32 %v155, 4294901760
    %551 = vmatpush1.msra.mxu0 %v550
    %552 = vmatprep.subr.mxu0 0.0
    %v553 = vand.u32 %v154, 4294901760
    %554 = vmatpush1.msra.mxu0 %v553
    %555 = vmatprep.subr.mxu0 0.0
    %v556 = vand.u32 %v153, 4294901760
    %557 = vmatpush1.msra.mxu0 %v556
    %558 = vmatprep.subr.mxu0 0.0
    %v559 = vand.u32 %v152, 4294901760
    %560 = vmatpush1.msra.mxu0 %v559
    %561 = vmatprep.subr.mxu0 0.0
    %v562 = vand.u32 %v151, 4294901760
    %563 = vmatpush1.msra.mxu0 %v562
    %564 = vmatprep.subr.mxu0 0.0
    %v565 = vand.u32 %v150, 4294901760
    %566 = vmatpush1.msra.mxu0 %v565
    %567 = vmatprep.subr.mxu0 0.0
    %v568 = vand.u32 %v149, 4294901760
    %569 = vmatpush1.msra.mxu0 %v568
    %570 = vmatprep.subr.mxu0 0.0
    %v571 = vand.u32 %v148, 4294901760
    %572 = vmatpush1.msra.mxu0 %v571
    %573 = vmatprep.subr.mxu0 0.0
    %v574 = vand.u32 %v147, 4294901760
    %575 = vmatpush1.msra.mxu0 %v574
    %576 = vmatprep.subr.mxu0 0.0
    %v577 = vand.u32 %v146, 4294901760
    %578 = vmatpush1.msra.mxu0 %v577
    %579 = vmatprep.subr.mxu0 0.0
    %580 = vmatpush2.msra.mxu0 0.0
    %581 = vmatprep.subr.mxu0 0.0
    %582 = vmatpush2.msra.mxu0 0.0
    %583 = vmatprep.subr.mxu0 0.0
    %584 = vmatpush2.msra.mxu0 0.0
    %585 = vmatprep.subr.mxu0 0.0
    %586 = vmatpush2.msra.mxu0 0.0
    %587 = vmatprep.subr.mxu0 0.0
    %588 = vmatpush2.msra.mxu0 0.0
    %589 = vmatprep.subr.mxu0 0.0
    %590 = vmatpush2.msra.mxu0 0.0
    %591 = vmatprep.subr.mxu0 0.0
    %592 = vmatpush2.msra.mxu0 0.0
    %593 = vmatprep.subr.mxu0 0.0
    %594 = vmatpush2.msra.mxu0 0.0
    %595 = vmatprep.subr.mxu0 0.0
    %596 = vmatpush2.msra.mxu0 0.0
    %597 = vmatprep.subr.mxu0 0.0
    %598 = vmatpush2.msra.mxu0 0.0
    %599 = vmatprep.subr.mxu0 0.0
    %600 = vmatpush2.msra.mxu0 0.0
    %601 = vmatprep.subr.mxu0 0.0
    %602 = vmatpush2.msra.mxu0 0.0
    %603 = vmatprep.subr.mxu0 0.0
    %604 = vmatpush2.msra.mxu0 0.0
    %605 = vmatprep.subr.mxu0 0.0
    %606 = vmatpush2.msra.mxu0 0.0
    %607 = vmatprep.subr.mxu0 0.0
    %608 = vmatpush2.msra.mxu0 0.0
    %609 = vmatprep.subr.mxu0 0.0
    %610 = vmatpush2.msra.mxu0 0.0
    %611 = vmatprep.mubr.f32.mxu0 0.0
    %v612 = vand.u32 %v144, 4294901760
    %v613 = vsub.f32 %v144, %v612
    %v614 = vand.u32 %v613, 4294901760
    %615 = vmatmul.mubr.f32.gmra.mxu0 %v614
    %v616 = vpop.f32.mrf.mxu0
    %v617 = vadd.f32 %v521, %v616
    %v618 = vpop.f32.mrf.mxu0
    %619 = vmatprep.mubr.f32.mxu0 0.0
    %v620 = vand.u32 %v145, 4294901760
    %v621 = vsub.f32 %v145, %v620
    %v622 = vand.u32 %v621, 4294901760
    %623 = vmatmul.mubr.f32.gmra.mxu0 %v622
    %v624 = vpop.f32.mrf.mxu0
    %v625 = vadd.f32 %v528, %v624
    %v626 = vpop.f32.mrf.mxu0
    %627 = vdwg.mxu0
    %628 = vmatprep.subr.mxu0 0.0
    %v629 = vand.u32 %v161, 4294901760
    %v630 = vsub.f32 %v161, %v629
    %v631 = vand.u32 %v630, 4294901760
    %632 = vmatpush1.msra.mxu0 %v631
    %633 = vmatprep.subr.mxu0 0.0
    %v634 = vand.u32 %v160, 4294901760
    %v635 = vsub.f32 %v160, %v634
    %v636 = vand.u32 %v635, 4294901760
    %637 = vmatpush1.msra.mxu0 %v636
    %638 = vmatprep.subr.mxu0 0.0
    %v639 = vand.u32 %v159, 4294901760
    %v640 = vsub.f32 %v159, %v639
    %v641 = vand.u32 %v640, 4294901760
    %642 = vmatpush1.msra.mxu0 %v641
    %643 = vmatprep.subr.mxu0 0.0
    %v644 = vand.u32 %v158, 4294901760
    %v645 = vsub.f32 %v158, %v644
    %v646 = vand.u32 %v645, 4294901760
    %647 = vmatpush1.msra.mxu0 %v646
    %648 = vmatprep.subr.mxu0 0.0
    %v649 = vand.u32 %v157, 4294901760
    %v650 = vsub.f32 %v157, %v649
    %v651 = vand.u32 %v650, 4294901760
    %652 = vmatpush1.msra.mxu0 %v651
    %653 = vmatprep.subr.mxu0 0.0
    %v654 = vand.u32 %v156, 4294901760
    %v655 = vsub.f32 %v156, %v654
    %v656 = vand.u32 %v655, 4294901760
    %657 = vmatpush1.msra.mxu0 %v656
    %658 = vmatprep.subr.mxu0 0.0
    %v659 = vand.u32 %v155, 4294901760
    %v660 = vsub.f32 %v155, %v659
    %v661 = vand.u32 %v660, 4294901760
    %662 = vmatpush1.msra.mxu0 %v661
    %663 = vmatprep.subr.mxu0 0.0
    %v664 = vand.u32 %v154, 4294901760
    %v665 = vsub.f32 %v154, %v664
    %v666 = vand.u32 %v665, 4294901760
    %667 = vmatpush1.msra.mxu0 %v666
    %668 = vmatprep.subr.mxu0 0.0
    %v669 = vand.u32 %v153, 4294901760
    %v670 = vsub.f32 %v153, %v669
    %v671 = vand.u32 %v670, 4294901760
    %672 = vmatpush1.msra.mxu0 %v671
    %673 = vmatprep.subr.mxu0 0.0
    %v674 = vand.u32 %v152, 4294901760
    %v675 = vsub.f32 %v152, %v674
    %v676 = vand.u32 %v675, 4294901760
    %677 = vmatpush1.msra.mxu0 %v676
    %678 = vmatprep.subr.mxu0 0.0
    %v679 = vand.u32 %v151, 4294901760
    %v680 = vsub.f32 %v151, %v679
    %v681 = vand.u32 %v680, 4294901760
    %682 = vmatpush1.msra.mxu0 %v681
    %683 = vmatprep.subr.mxu0 0.0
    %v684 = vand.u32 %v150, 4294901760
    %v685 = vsub.f32 %v150, %v684
    %v686 = vand.u32 %v685, 4294901760
    %687 = vmatpush1.msra.mxu0 %v686
    %688 = vmatprep.subr.mxu0 0.0
    %v689 = vand.u32 %v149, 4294901760
    %v690 = vsub.f32 %v149, %v689
    %v691 = vand.u32 %v690, 4294901760
    %692 = vmatpush1.msra.mxu0 %v691
    %693 = vmatprep.subr.mxu0 0.0
    %v694 = vand.u32 %v148, 4294901760
    %v695 = vsub.f32 %v148, %v694
    %v696 = vand.u32 %v695, 4294901760
    %697 = vmatpush1.msra.mxu0 %v696
    %698 = vmatprep.subr.mxu0 0.0
    %v699 = vand.u32 %v147, 4294901760
    %v700 = vsub.f32 %v147, %v699
    %v701 = vand.u32 %v700, 4294901760
    %702 = vmatpush1.msra.mxu0 %v701
    %703 = vmatprep.subr.mxu0 0.0
    %v704 = vand.u32 %v146, 4294901760
    %v705 = vsub.f32 %v146, %v704
    %v706 = vand.u32 %v705, 4294901760
    %707 = vmatpush1.msra.mxu0 %v706
    %708 = vmatprep.subr.mxu0 0.0
    %709 = vmatpush2.msra.mxu0 0.0
    %710 = vmatprep.subr.mxu0 0.0
    %711 = vmatpush2.msra.mxu0 0.0
    %712 = vmatprep.subr.mxu0 0.0
    %713 = vmatpush2.msra.mxu0 0.0
    %714 = vmatprep.subr.mxu0 0.0
    %715 = vmatpush2.msra.mxu0 0.0
    %716 = vmatprep.subr.mxu0 0.0
    %717 = vmatpush2.msra.mxu0 0.0
    %718 = vmatprep.subr.mxu0 0.0
    %719 = vmatpush2.msra.mxu0 0.0
    %720 = vmatprep.subr.mxu0 0.0
    %721 = vmatpush2.msra.mxu0 0.0
    %722 = vmatprep.subr.mxu0 0.0
    %723 = vmatpush2.msra.mxu0 0.0
    %724 = vmatprep.subr.mxu0 0.0
    %725 = vmatpush2.msra.mxu0 0.0
    %726 = vmatprep.subr.mxu0 0.0
    %727 = vmatpush2.msra.mxu0 0.0
    %728 = vmatprep.subr.mxu0 0.0
    %729 = vmatpush2.msra.mxu0 0.0
    %730 = vmatprep.subr.mxu0 0.0
    %731 = vmatpush2.msra.mxu0 0.0
    %732 = vmatprep.subr.mxu0 0.0
    %733 = vmatpush2.msra.mxu0 0.0
    %734 = vmatprep.subr.mxu0 0.0
    %735 = vmatpush2.msra.mxu0 0.0
    %736 = vmatprep.subr.mxu0 0.0
    %737 = vmatpush2.msra.mxu0 0.0
    %738 = vmatprep.subr.mxu0 0.0
    %739 = vmatpush2.msra.mxu0 0.0
    %740 = vmatprep.mubr.f32.mxu0 0.0
    %v741 = vand.u32 %v144, 4294901760
    %742 = vmatmul.mubr.f32.gmra.mxu0 %v741
    %v743 = vpop.f32.mrf.mxu0
    %v744 = vadd.f32 %v617, %v743
    %v745 = vpop.f32.mrf.mxu0
    %746 = vmatprep.mubr.f32.mxu0 0.0
    %v747 = vand.u32 %v145, 4294901760
    %748 = vmatmul.mubr.f32.gmra.mxu0 %v747
    %v749 = vpop.f32.mrf.mxu0
    %v750 = vadd.f32 %v625, %v749
    %v751 = vpop.f32.mrf.mxu0
    %752 = vdwg.mxu0
    %753 = vmatprep.subr.mxu0 0.0
    %v754 = vand.u32 %v161, 4294901760
    %755 = vmatpush1.msra.mxu0 %v754
    %756 = vmatprep.subr.mxu0 0.0
    %v757 = vand.u32 %v160, 4294901760
    %758 = vmatpush1.msra.mxu0 %v757
    %759 = vmatprep.subr.mxu0 0.0
    %v760 = vand.u32 %v159, 4294901760
    %761 = vmatpush1.msra.mxu0 %v760
    %762 = vmatprep.subr.mxu0 0.0
    %v763 = vand.u32 %v158, 4294901760
    %764 = vmatpush1.msra.mxu0 %v763
    %765 = vmatprep.subr.mxu0 0.0
    %v766 = vand.u32 %v157, 4294901760
    %767 = vmatpush1.msra.mxu0 %v766
    %768 = vmatprep.subr.mxu0 0.0
    %v769 = vand.u32 %v156, 4294901760
    %770 = vmatpush1.msra.mxu0 %v769
    %771 = vmatprep.subr.mxu0 0.0
    %v772 = vand.u32 %v155, 4294901760
    %773 = vmatpush1.msra.mxu0 %v772
    %774 = vmatprep.subr.mxu0 0.0
    %v775 = vand.u32 %v154, 4294901760
    %776 = vmatpush1.msra.mxu0 %v775
    %777 = vmatprep.subr.mxu0 0.0
    %v778 = vand.u32 %v153, 4294901760
    %779 = vmatpush1.msra.mxu0 %v778
    %780 = vmatprep.subr.mxu0 0.0
    %v781 = vand.u32 %v152, 4294901760
    %782 = vmatpush1.msra.mxu0 %v781
    %783 = vmatprep.subr.mxu0 0.0
    %v784 = vand.u32 %v151, 4294901760
    %785 = vmatpush1.msra.mxu0 %v784
    %786 = vmatprep.subr.mxu0 0.0
    %v787 = vand.u32 %v150, 4294901760
    %788 = vmatpush1.msra.mxu0 %v787
    %789 = vmatprep.subr.mxu0 0.0
    %v790 = vand.u32 %v149, 4294901760
    %791 = vmatpush1.msra.mxu0 %v790
    %792 = vmatprep.subr.mxu0 0.0
    %v793 = vand.u32 %v148, 4294901760
    %794 = vmatpush1.msra.mxu0 %v793
    %795 = vmatprep.subr.mxu0 0.0
    %v796 = vand.u32 %v147, 4294901760
    %797 = vmatpush1.msra.mxu0 %v796
    %798 = vmatprep.subr.mxu0 0.0
    %v799 = vand.u32 %v146, 4294901760
    %800 = vmatpush1.msra.mxu0 %v799
    %801 = vmatprep.subr.mxu0 0.0
    %802 = vmatpush2.msra.mxu0 0.0
    %803 = vmatprep.subr.mxu0 0.0
    %804 = vmatpush2.msra.mxu0 0.0
    %805 = vmatprep.subr.mxu0 0.0
    %806 = vmatpush2.msra.mxu0 0.0
    %807 = vmatprep.subr.mxu0 0.0
    %808 = vmatpush2.msra.mxu0 0.0
    %809 = vmatprep.subr.mxu0 0.0
    %810 = vmatpush2.msra.mxu0 0.0
    %811 = vmatprep.subr.mxu0 0.0
    %812 = vmatpush2.msra.mxu0 0.0
    %813 = vmatprep.subr.mxu0 0.0
    %814 = vmatpush2.msra.mxu0 0.0
    %815 = vmatprep.subr.mxu0 0.0
    %816 = vmatpush2.msra.mxu0 0.0
    %817 = vmatprep.subr.mxu0 0.0
    %818 = vmatpush2.msra.mxu0 0.0
    %819 = vmatprep.subr.mxu0 0.0
    %820 = vmatpush2.msra.mxu0 0.0
    %821 = vmatprep.subr.mxu0 0.0
    %822 = vmatpush2.msra.mxu0 0.0
    %823 = vmatprep.subr.mxu0 0.0
    %824 = vmatpush2.msra.mxu0 0.0
    %825 = vmatprep.subr.mxu0 0.0
    %826 = vmatpush2.msra.mxu0 0.0
    %827 = vmatprep.subr.mxu0 0.0
    %828 = vmatpush2.msra.mxu0 0.0
    %829 = vmatprep.subr.mxu0 0.0
    %830 = vmatpush2.msra.mxu0 0.0
    %831 = vmatprep.subr.mxu0 0.0
    %832 = vmatpush2.msra.mxu0 0.0
    %833 = vmatprep.mubr.f32.mxu0 0.0
    %v834 = vand.u32 %v144, 4294901760
    %835 = vmatmul.mubr.f32.gmra.mxu0 %v834
    %v836 = vpop.f32.mrf.mxu0
    %v837 = vadd.f32 %v744, %v836
    %v838 = vpop.f32.mrf.mxu0
    %839 = vmatprep.mubr.f32.mxu0 0.0
    %v840 = vand.u32 %v145, 4294901760
    %841 = vmatmul.mubr.f32.gmra.mxu0 %v840
    %v842 = vpop.f32.mrf.mxu0
    %v843 = vadd.f32 %v750, %v842
    %v844 = vpop.f32.mrf.mxu0
    %845 = vdwg.mxu0
    %846 = vmatprep.subr.mxu0 0.0
    %v847 = vand.u32 %v161, 4294901760
    %848 = vmatpush1.msra.mxu0 %v847
    %849 = vmatprep.subr.mxu0 0.0
    %v850 = vand.u32 %v160, 4294901760
    %851 = vmatpush1.msra.mxu0 %v850
    %852 = vmatprep.subr.mxu0 0.0
    %v853 = vand.u32 %v159, 4294901760
    %854 = vmatpush1.msra.mxu0 %v853
    %855 = vmatprep.subr.mxu0 0.0
    %v856 = vand.u32 %v158, 4294901760
    %857 = vmatpush1.msra.mxu0 %v856
    %858 = vmatprep.subr.mxu0 0.0
    %v859 = vand.u32 %v157, 4294901760
    %860 = vmatpush1.msra.mxu0 %v859
    %861 = vmatprep.subr.mxu0 0.0
    %v862 = vand.u32 %v156, 4294901760
    %863 = vmatpush1.msra.mxu0 %v862
    %864 = vmatprep.subr.mxu0 0.0
    %v865 = vand.u32 %v155, 4294901760
    %866 = vmatpush1.msra.mxu0 %v865
    %867 = vmatprep.subr.mxu0 0.0
    %v868 = vand.u32 %v154, 4294901760
    %869 = vmatpush1.msra.mxu0 %v868
    %870 = vmatprep.subr.mxu0 0.0
    %v871 = vand.u32 %v153, 4294901760
    %872 = vmatpush1.msra.mxu0 %v871
    %873 = vmatprep.subr.mxu0 0.0
    %v874 = vand.u32 %v152, 4294901760
    %875 = vmatpush1.msra.mxu0 %v874
    %876 = vmatprep.subr.mxu0 0.0
    %v877 = vand.u32 %v151, 4294901760
    %878 = vmatpush1.msra.mxu0 %v877
    %879 = vmatprep.subr.mxu0 0.0
    %v880 = vand.u32 %v150, 4294901760
    %881 = vmatpush1.msra.mxu0 %v880
    %882 = vmatprep.subr.mxu0 0.0
    %v883 = vand.u32 %v149, 4294901760
    %884 = vmatpush1.msra.mxu0 %v883
    %885 = vmatprep.subr.mxu0 0.0
    %v886 = vand.u32 %v148, 4294901760
    %887 = vmatpush1.msra.mxu0 %v886
    %888 = vmatprep.subr.mxu0 0.0
    %v889 = vand.u32 %v147, 4294901760
    %890 = vmatpush1.msra.mxu0 %v889
    %891 = vmatprep.subr.mxu0 0.0
    %v892 = vand.u32 %v146, 4294901760
    %893 = vmatpush1.msra.mxu0 %v892
    %894 = vmatprep.subr.mxu0 0.0
    %895 = vmatpush2.msra.mxu0 0.0
    %896 = vmatprep.subr.mxu0 0.0
    %897 = vmatpush2.msra.mxu0 0.0
    %898 = vmatprep.subr.mxu0 0.0
    %899 = vmatpush2.msra.mxu0 0.0
    %900 = vmatprep.subr.mxu0 0.0
    %901 = vmatpush2.msra.mxu0 0.0
    %902 = vmatprep.subr.mxu0 0.0
    %903 = vmatpush2.msra.mxu0 0.0
    %904 = vmatprep.subr.mxu0 0.0
    %905 = vmatpush2.msra.mxu0 0.0
    %906 = vmatprep.subr.mxu0 0.0
    %907 = vmatpush2.msra.mxu0 0.0
    %908 = vmatprep.subr.mxu0 0.0
    %909 = vmatpush2.msra.mxu0 0.0
    %910 = vmatprep.subr.mxu0 0.0
    %911 = vmatpush2.msra.mxu0 0.0
    %912 = vmatprep.subr.mxu0 0.0
    %913 = vmatpush2.msra.mxu0 0.0
    %914 = vmatprep.subr.mxu0 0.0
    %915 = vmatpush2.msra.mxu0 0.0
    %916 = vmatprep.subr.mxu0 0.0
    %917 = vmatpush2.msra.mxu0 0.0
    %918 = vmatprep.subr.mxu0 0.0
    %919 = vmatpush2.msra.mxu0 0.0
    %920 = vmatprep.subr.mxu0 0.0
    %921 = vmatpush2.msra.mxu0 0.0
    %922 = vmatprep.subr.mxu0 0.0
    %923 = vmatpush2.msra.mxu0 0.0
    %924 = vmatprep.subr.mxu0 0.0
    %925 = vmatpush2.msra.mxu0 0.0
    %926 = vmatprep.mubr.f32.mxu0 0.0
    %v927 = vand.u32 %v142, 4294901760
    %v928 = vsub.f32 %v142, %v927
    %v929 = vand.u32 %v928, 4294901760
    %v930 = vsub.f32 %v928, %v929
    %v931 = vand.u32 %v930, 4294901760
    %932 = vmatmul.mubr.f32.gmra.mxu0 %v931
    %v933 = vpop.f32.mrf.mxu0
    %v934 = vadd.f32 0.01, %v933
    %v935 = vpop.f32.mrf.mxu0
    %936 = vmatprep.mubr.f32.mxu0 0.0
    %v937 = vand.u32 %v143, 4294901760
    %v938 = vsub.f32 %v143, %v937
    %v939 = vand.u32 %v938, 4294901760
    %v940 = vsub.f32 %v938, %v939
    %v941 = vand.u32 %v940, 4294901760
    %942 = vmatmul.mubr.f32.gmra.mxu0 %v941
    %v943 = vpop.f32.mrf.mxu0
    %v944 = vadd.f32 0.01, %v943
    %v945 = vpop.f32.mrf.mxu0
    %946 = vdwg.mxu0
    %947 = vmatprep.subr.mxu0 0.0
    %v948 = vand.u32 %v161, 4294901760
    %v949 = vsub.f32 %v161, %v948
    %v950 = vand.u32 %v949, 4294901760
    %v951 = vsub.f32 %v949, %v950
    %v952 = vand.u32 %v951, 4294901760
    %953 = vmatpush1.msra.mxu0 %v952
    %954 = vmatprep.subr.mxu0 0.0
    %v955 = vand.u32 %v160, 4294901760
    %v956 = vsub.f32 %v160, %v955
    %v957 = vand.u32 %v956, 4294901760
    %v958 = vsub.f32 %v956, %v957
    %v959 = vand.u32 %v958, 4294901760
    %960 = vmatpush1.msra.mxu0 %v959
    %961 = vmatprep.subr.mxu0 0.0
    %v962 = vand.u32 %v159, 4294901760
    %v963 = vsub.f32 %v159, %v962
    %v964 = vand.u32 %v963, 4294901760
    %v965 = vsub.f32 %v963, %v964
    %v966 = vand.u32 %v965, 4294901760
    %967 = vmatpush1.msra.mxu0 %v966
    %968 = vmatprep.subr.mxu0 0.0
    %v969 = vand.u32 %v158, 4294901760
    %v970 = vsub.f32 %v158, %v969
    %v971 = vand.u32 %v970, 4294901760
    %v972 = vsub.f32 %v970, %v971
    %v973 = vand.u32 %v972, 4294901760
    %974 = vmatpush1.msra.mxu0 %v973
    %975 = vmatprep.subr.mxu0 0.0
    %v976 = vand.u32 %v157, 4294901760
    %v977 = vsub.f32 %v157, %v976
    %v978 = vand.u32 %v977, 4294901760
    %v979 = vsub.f32 %v977, %v978
    %v980 = vand.u32 %v979, 4294901760
    %981 = vmatpush1.msra.mxu0 %v980
    %982 = vmatprep.subr.mxu0 0.0
    %v983 = vand.u32 %v156, 4294901760
    %v984 = vsub.f32 %v156, %v983
    %v985 = vand.u32 %v984, 4294901760
    %v986 = vsub.f32 %v984, %v985
    %v987 = vand.u32 %v986, 4294901760
    %988 = vmatpush1.msra.mxu0 %v987
    %989 = vmatprep.subr.mxu0 0.0
    %v990 = vand.u32 %v155, 4294901760
    %v991 = vsub.f32 %v155, %v990
    %v992 = vand.u32 %v991, 4294901760
    %v993 = vsub.f32 %v991, %v992
    %v994 = vand.u32 %v993, 4294901760
    %995 = vmatpush1.msra.mxu0 %v994
    %996 = vmatprep.subr.mxu0 0.0
    %v997 = vand.u32 %v154, 4294901760
    %v998 = vsub.f32 %v154, %v997
    %v999 = vand.u32 %v998, 4294901760
    %v1000 = vsub.f32 %v998, %v999
    %v1001 = vand.u32 %v1000, 4294901760
    %1002 = vmatpush1.msra.mxu0 %v1001
    %1003 = vmatprep.subr.mxu0 0.0
    %v1004 = vand.u32 %v153, 4294901760
    %v1005 = vsub.f32 %v153, %v1004
    %v1006 = vand.u32 %v1005, 4294901760
    %v1007 = vsub.f32 %v1005, %v1006
    %v1008 = vand.u32 %v1007, 4294901760
    %1009 = vmatpush1.msra.mxu0 %v1008
    %1010 = vmatprep.subr.mxu0 0.0
    %v1011 = vand.u32 %v152, 4294901760
    %v1012 = vsub.f32 %v152, %v1011
    %v1013 = vand.u32 %v1012, 4294901760
    %v1014 = vsub.f32 %v1012, %v1013
    %v1015 = vand.u32 %v1014, 4294901760
    %1016 = vmatpush1.msra.mxu0 %v1015
    %1017 = vmatprep.subr.mxu0 0.0
    %v1018 = vand.u32 %v151, 4294901760
    %v1019 = vsub.f32 %v151, %v1018
    %v1020 = vand.u32 %v1019, 4294901760
    %v1021 = vsub.f32 %v1019, %v1020
    %v1022 = vand.u32 %v1021, 4294901760
    %1023 = vmatpush1.msra.mxu0 %v1022
    %1024 = vmatprep.subr.mxu0 0.0
    %v1025 = vand.u32 %v150, 4294901760
    %v1026 = vsub.f32 %v150, %v1025
    %v1027 = vand.u32 %v1026, 4294901760
    %v1028 = vsub.f32 %v1026, %v1027
    %v1029 = vand.u32 %v1028, 4294901760
    %1030 = vmatpush1.msra.mxu0 %v1029
    %1031 = vmatprep.subr.mxu0 0.0
    %v1032 = vand.u32 %v149, 4294901760
    %v1033 = vsub.f32 %v149, %v1032
    %v1034 = vand.u32 %v1033, 4294901760
    %v1035 = vsub.f32 %v1033, %v1034
    %v1036 = vand.u32 %v1035, 4294901760
    %1037 = vmatpush1.msra.mxu0 %v1036
    %1038 = vmatprep.subr.mxu0 0.0
    %v1039 = vand.u32 %v148, 4294901760
    %v1040 = vsub.f32 %v148, %v1039
    %v1041 = vand.u32 %v1040, 4294901760
    %v1042 = vsub.f32 %v1040, %v1041
    %v1043 = vand.u32 %v1042, 4294901760
    %1044 = vmatpush1.msra.mxu0 %v1043
    %1045 = vmatprep.subr.mxu0 0.0
    %v1046 = vand.u32 %v147, 4294901760
    %v1047 = vsub.f32 %v147, %v1046
    %v1048 = vand.u32 %v1047, 4294901760
    %v1049 = vsub.f32 %v1047, %v1048
    %v1050 = vand.u32 %v1049, 4294901760
    %1051 = vmatpush1.msra.mxu0 %v1050
    %1052 = vmatprep.subr.mxu0 0.0
    %v1053 = vand.u32 %v146, 4294901760
    %v1054 = vsub.f32 %v146, %v1053
    %v1055 = vand.u32 %v1054, 4294901760
    %v1056 = vsub.f32 %v1054, %v1055
    %v1057 = vand.u32 %v1056, 4294901760
    %1058 = vmatpush1.msra.mxu0 %v1057
    %1059 = vmatprep.subr.mxu0 0.0
    %1060 = vmatpush2.msra.mxu0 0.0
    %1061 = vmatprep.subr.mxu0 0.0
    %1062 = vmatpush2.msra.mxu0 0.0
    %1063 = vmatprep.subr.mxu0 0.0
    %1064 = vmatpush2.msra.mxu0 0.0
    %1065 = vmatprep.subr.mxu0 0.0
    %1066 = vmatpush2.msra.mxu0 0.0
    %1067 = vmatprep.subr.mxu0 0.0
    %1068 = vmatpush2.msra.mxu0 0.0
    %1069 = vmatprep.subr.mxu0 0.0
    %1070 = vmatpush2.msra.mxu0 0.0
    %1071 = vmatprep.subr.mxu0 0.0
    %1072 = vmatpush2.msra.mxu0 0.0
    %1073 = vmatprep.subr.mxu0 0.0
    %1074 = vmatpush2.msra.mxu0 0.0
    %1075 = vmatprep.subr.mxu0 0.0
    %1076 = vmatpush2.msra.mxu0 0.0
    %1077 = vmatprep.subr.mxu0 0.0
    %1078 = vmatpush2.msra.mxu0 0.0
    %1079 = vmatprep.subr.mxu0 0.0
    %1080 = vmatpush2.msra.mxu0 0.0
    %1081 = vmatprep.subr.mxu0 0.0
    %1082 = vmatpush2.msra.mxu0 0.0
    %1083 = vmatprep.subr.mxu0 0.0
    %1084 = vmatpush2.msra.mxu0 0.0
    %1085 = vmatprep.subr.mxu0 0.0
    %1086 = vmatpush2.msra.mxu0 0.0
    %1087 = vmatprep.subr.mxu0 0.0
    %1088 = vmatpush2.msra.mxu0 0.0
    %1089 = vmatprep.subr.mxu0 0.0
    %1090 = vmatpush2.msra.mxu0 0.0
    %1091 = vmatprep.mubr.f32.mxu0 0.0
    %v1092 = vand.u32 %v142, 4294901760
    %1093 = vmatmul.mubr.f32.gmra.mxu0 %v1092
    %v1094 = vpop.f32.mrf.mxu0
    %v1095 = vadd.f32 %v934, %v1094
    %v1096 = vpop.f32.mrf.mxu0
    %1097 = vmatprep.mubr.f32.mxu0 0.0
    %v1098 = vand.u32 %v143, 4294901760
    %1099 = vmatmul.mubr.f32.gmra.mxu0 %v1098
    %v1100 = vpop.f32.mrf.mxu0
    %v1101 = vadd.f32 %v944, %v1100
    %v1102 = vpop.f32.mrf.mxu0
    %1103 = vdwg.mxu0
    %1104 = vmatprep.subr.mxu0 0.0
    %v1105 = vand.u32 %v161, 4294901760
    %v1106 = vsub.f32 %v161, %v1105
    %1107 = vmatpush1.msra.mxu0 %v1106
    %1108 = vmatprep.subr.mxu0 0.0
    %v1109 = vand.u32 %v160, 4294901760
    %v1110 = vsub.f32 %v160, %v1109
    %1111 = vmatpush1.msra.mxu0 %v1110
    %1112 = vmatprep.subr.mxu0 0.0
    %v1113 = vand.u32 %v159, 4294901760
    %v1114 = vsub.f32 %v159, %v1113
    %1115 = vmatpush1.msra.mxu0 %v1114
    %1116 = vmatprep.subr.mxu0 0.0
    %v1117 = vand.u32 %v158, 4294901760
    %v1118 = vsub.f32 %v158, %v1117
    %1119 = vmatpush1.msra.mxu0 %v1118
    %1120 = vmatprep.subr.mxu0 0.0
    %v1121 = vand.u32 %v157, 4294901760
    %v1122 = vsub.f32 %v157, %v1121
    %1123 = vmatpush1.msra.mxu0 %v1122
    %1124 = vmatprep.subr.mxu0 0.0
    %v1125 = vand.u32 %v156, 4294901760
    %v1126 = vsub.f32 %v156, %v1125
    %1127 = vmatpush1.msra.mxu0 %v1126
    %1128 = vmatprep.subr.mxu0 0.0
    %v1129 = vand.u32 %v155, 4294901760
    %v1130 = vsub.f32 %v155, %v1129
    %1131 = vmatpush1.msra.mxu0 %v1130
    %1132 = vmatprep.subr.mxu0 0.0
    %v1133 = vand.u32 %v154, 4294901760
    %v1134 = vsub.f32 %v154, %v1133
    %1135 = vmatpush1.msra.mxu0 %v1134
    %1136 = vmatprep.subr.mxu0 0.0
    %v1137 = vand.u32 %v153, 4294901760
    %v1138 = vsub.f32 %v153, %v1137
    %1139 = vmatpush1.msra.mxu0 %v1138
    %1140 = vmatprep.subr.mxu0 0.0
    %v1141 = vand.u32 %v152, 4294901760
    %v1142 = vsub.f32 %v152, %v1141
    %1143 = vmatpush1.msra.mxu0 %v1142
    %1144 = vmatprep.subr.mxu0 0.0
    %v1145 = vand.u32 %v151, 4294901760
    %v1146 = vsub.f32 %v151, %v1145
    %1147 = vmatpush1.msra.mxu0 %v1146
    %1148 = vmatprep.subr.mxu0 0.0
    %v1149 = vand.u32 %v150, 4294901760
    %v1150 = vsub.f32 %v150, %v1149
    %1151 = vmatpush1.msra.mxu0 %v1150
    %1152 = vmatprep.subr.mxu0 0.0
    %v1153 = vand.u32 %v149, 4294901760
    %v1154 = vsub.f32 %v149, %v1153
    %1155 = vmatpush1.msra.mxu0 %v1154
    %1156 = vmatprep.subr.mxu0 0.0
    %v1157 = vand.u32 %v148, 4294901760
    %v1158 = vsub.f32 %v148, %v1157
    %1159 = vmatpush1.msra.mxu0 %v1158
    %1160 = vmatprep.subr.mxu0 0.0
    %v1161 = vand.u32 %v147, 4294901760
    %v1162 = vsub.f32 %v147, %v1161
    %1163 = vmatpush1.msra.mxu0 %v1162
    %1164 = vmatprep.subr.mxu0 0.0
    %v1165 = vand.u32 %v146, 4294901760
    %v1166 = vsub.f32 %v146, %v1165
    %1167 = vmatpush1.msra.mxu0 %v1166
    %1168 = vmatprep.subr.mxu0 0.0
    %1169 = vmatpush2.msra.mxu0 0.0
    %1170 = vmatprep.subr.mxu0 0.0
    %1171 = vmatpush2.msra.mxu0 0.0
    %1172 = vmatprep.subr.mxu0 0.0
    %1173 = vmatpush2.msra.mxu0 0.0
    %1174 = vmatprep.subr.mxu0 0.0
    %1175 = vmatpush2.msra.mxu0 0.0
    %1176 = vmatprep.subr.mxu0 0.0
    %1177 = vmatpush2.msra.mxu0 0.0
    %1178 = vmatprep.subr.mxu0 0.0
    %1179 = vmatpush2.msra.mxu0 0.0
    %1180 = vmatprep.subr.mxu0 0.0
    %1181 = vmatpush2.msra.mxu0 0.0
    %1182 = vmatprep.subr.mxu0 0.0
    %1183 = vmatpush2.msra.mxu0 0.0
    %1184 = vmatprep.subr.mxu0 0.0
    %1185 = vmatpush2.msra.mxu0 0.0
    %1186 = vmatprep.subr.mxu0 0.0
    %1187 = vmatpush2.msra.mxu0 0.0
    %1188 = vmatprep.subr.mxu0 0.0
    %1189 = vmatpush2.msra.mxu0 0.0
    %1190 = vmatprep.subr.mxu0 0.0
    %1191 = vmatpush2.msra.mxu0 0.0
    %1192 = vmatprep.subr.mxu0 0.0
    %1193 = vmatpush2.msra.mxu0 0.0
    %1194 = vmatprep.subr.mxu0 0.0
    %1195 = vmatpush2.msra.mxu0 0.0
    %1196 = vmatprep.subr.mxu0 0.0
    %1197 = vmatpush2.msra.mxu0 0.0
    %1198 = vmatprep.subr.mxu0 0.0
    %1199 = vmatpush2.msra.mxu0 0.0
    %1200 = vmatprep.mubr.f32.mxu0 0.0
    %v1201 = vand.u32 %v142, 4294901760
    %v1202 = vsub.f32 %v142, %v1201
    %1203 = vmatmul.mubr.f32.gmra.mxu0 %v1202
    %v1204 = vpop.f32.mrf.mxu0
    %v1205 = vadd.f32 %v1095, %v1204
    %v1206 = vpop.f32.mrf.mxu0
    %1207 = vmatprep.mubr.f32.mxu0 0.0
    %v1208 = vand.u32 %v143, 4294901760
    %v1209 = vsub.f32 %v143, %v1208
    %1210 = vmatmul.mubr.f32.gmra.mxu0 %v1209
    %v1211 = vpop.f32.mrf.mxu0
    %v1212 = vadd.f32 %v1101, %v1211
    %v1213 = vpop.f32.mrf.mxu0
    %1214 = vdwg.mxu0
    %1215 = vmatprep.subr.mxu0 0.0
    %v1216 = vand.u32 %v161, 4294901760
    %1217 = vmatpush1.msra.mxu0 %v1216
    %1218 = vmatprep.subr.mxu0 0.0
    %v1219 = vand.u32 %v160, 4294901760
    %1220 = vmatpush1.msra.mxu0 %v1219
    %1221 = vmatprep.subr.mxu0 0.0
    %v1222 = vand.u32 %v159, 4294901760
    %1223 = vmatpush1.msra.mxu0 %v1222
    %1224 = vmatprep.subr.mxu0 0.0
    %v1225 = vand.u32 %v158, 4294901760
    %1226 = vmatpush1.msra.mxu0 %v1225
    %1227 = vmatprep.subr.mxu0 0.0
    %v1228 = vand.u32 %v157, 4294901760
    %1229 = vmatpush1.msra.mxu0 %v1228
    %1230 = vmatprep.subr.mxu0 0.0
    %v1231 = vand.u32 %v156, 4294901760
    %1232 = vmatpush1.msra.mxu0 %v1231
    %1233 = vmatprep.subr.mxu0 0.0
    %v1234 = vand.u32 %v155, 4294901760
    %1235 = vmatpush1.msra.mxu0 %v1234
    %1236 = vmatprep.subr.mxu0 0.0
    %v1237 = vand.u32 %v154, 4294901760
    %1238 = vmatpush1.msra.mxu0 %v1237
    %1239 = vmatprep.subr.mxu0 0.0
    %v1240 = vand.u32 %v153, 4294901760
    %1241 = vmatpush1.msra.mxu0 %v1240
    %1242 = vmatprep.subr.mxu0 0.0
    %v1243 = vand.u32 %v152, 4294901760
    %1244 = vmatpush1.msra.mxu0 %v1243
    %1245 = vmatprep.subr.mxu0 0.0
    %v1246 = vand.u32 %v151, 4294901760
    %1247 = vmatpush1.msra.mxu0 %v1246
    %1248 = vmatprep.subr.mxu0 0.0
    %v1249 = vand.u32 %v150, 4294901760
    %1250 = vmatpush1.msra.mxu0 %v1249
    %1251 = vmatprep.subr.mxu0 0.0
    %v1252 = vand.u32 %v149, 4294901760
    %1253 = vmatpush1.msra.mxu0 %v1252
    %1254 = vmatprep.subr.mxu0 0.0
    %v1255 = vand.u32 %v148, 4294901760
    %1256 = vmatpush1.msra.mxu0 %v1255
    %1257 = vmatprep.subr.mxu0 0.0
    %v1258 = vand.u32 %v147, 4294901760
    %1259 = vmatpush1.msra.mxu0 %v1258
    %1260 = vmatprep.subr.mxu0 0.0
    %v1261 = vand.u32 %v146, 4294901760
    %1262 = vmatpush1.msra.mxu0 %v1261
    %1263 = vmatprep.subr.mxu0 0.0
    %1264 = vmatpush2.msra.mxu0 0.0
    %1265 = vmatprep.subr.mxu0 0.0
    %1266 = vmatpush2.msra.mxu0 0.0
    %1267 = vmatprep.subr.mxu0 0.0
    %1268 = vmatpush2.msra.mxu0 0.0
    %1269 = vmatprep.subr.mxu0 0.0
    %1270 = vmatpush2.msra.mxu0 0.0
    %1271 = vmatprep.subr.mxu0 0.0
    %1272 = vmatpush2.msra.mxu0 0.0
    %1273 = vmatprep.subr.mxu0 0.0
    %1274 = vmatpush2.msra.mxu0 0.0
    %1275 = vmatprep.subr.mxu0 0.0
    %1276 = vmatpush2.msra.mxu0 0.0
    %1277 = vmatprep.subr.mxu0 0.0
    %1278 = vmatpush2.msra.mxu0 0.0
    %1279 = vmatprep.subr.mxu0 0.0
    %1280 = vmatpush2.msra.mxu0 0.0
    %1281 = vmatprep.subr.mxu0 0.0
    %1282 = vmatpush2.msra.mxu0 0.0
    %1283 = vmatprep.subr.mxu0 0.0
    %1284 = vmatpush2.msra.mxu0 0.0
    %1285 = vmatprep.subr.mxu0 0.0
    %1286 = vmatpush2.msra.mxu0 0.0
    %1287 = vmatprep.subr.mxu0 0.0
    %1288 = vmatpush2.msra.mxu0 0.0
    %1289 = vmatprep.subr.mxu0 0.0
    %1290 = vmatpush2.msra.mxu0 0.0
    %1291 = vmatprep.subr.mxu0 0.0
    %1292 = vmatpush2.msra.mxu0 0.0
    %1293 = vmatprep.subr.mxu0 0.0
    %1294 = vmatpush2.msra.mxu0 0.0
    %1295 = vmatprep.mubr.f32.mxu0 0.0
    %v1296 = vand.u32 %v142, 4294901760
    %v1297 = vsub.f32 %v142, %v1296
    %v1298 = vand.u32 %v1297, 4294901760
    %1299 = vmatmul.mubr.f32.gmra.mxu0 %v1298
    %v1300 = vpop.f32.mrf.mxu0
    %v1301 = vadd.f32 %v1205, %v1300
    %v1302 = vpop.f32.mrf.mxu0
    %1303 = vmatprep.mubr.f32.mxu0 0.0
    %v1304 = vand.u32 %v143, 4294901760
    %v1305 = vsub.f32 %v143, %v1304
    %v1306 = vand.u32 %v1305, 4294901760
    %1307 = vmatmul.mubr.f32.gmra.mxu0 %v1306
    %v1308 = vpop.f32.mrf.mxu0
    %v1309 = vadd.f32 %v1212, %v1308
    %v1310 = vpop.f32.mrf.mxu0
    %1311 = vdwg.mxu0
    %1312 = vmatprep.subr.mxu0 0.0
    %v1313 = vand.u32 %v161, 4294901760
    %v1314 = vsub.f32 %v161, %v1313
    %v1315 = vand.u32 %v1314, 4294901760
    %1316 = vmatpush1.msra.mxu0 %v1315
    %1317 = vmatprep.subr.mxu0 0.0
    %v1318 = vand.u32 %v160, 4294901760
    %v1319 = vsub.f32 %v160, %v1318
    %v1320 = vand.u32 %v1319, 4294901760
    %1321 = vmatpush1.msra.mxu0 %v1320
    %1322 = vmatprep.subr.mxu0 0.0
    %v1323 = vand.u32 %v159, 4294901760
    %v1324 = vsub.f32 %v159, %v1323
    %v1325 = vand.u32 %v1324, 4294901760
    %1326 = vmatpush1.msra.mxu0 %v1325
    %1327 = vmatprep.subr.mxu0 0.0
    %v1328 = vand.u32 %v158, 4294901760
    %v1329 = vsub.f32 %v158, %v1328
    %v1330 = vand.u32 %v1329, 4294901760
    %1331 = vmatpush1.msra.mxu0 %v1330
    %1332 = vmatprep.subr.mxu0 0.0
    %v1333 = vand.u32 %v157, 4294901760
    %v1334 = vsub.f32 %v157, %v1333
    %v1335 = vand.u32 %v1334, 4294901760
    %1336 = vmatpush1.msra.mxu0 %v1335
    %1337 = vmatprep.subr.mxu0 0.0
    %v1338 = vand.u32 %v156, 4294901760
    %v1339 = vsub.f32 %v156, %v1338
    %v1340 = vand.u32 %v1339, 4294901760
    %1341 = vmatpush1.msra.mxu0 %v1340
    %1342 = vmatprep.subr.mxu0 0.0
    %v1343 = vand.u32 %v155, 4294901760
    %v1344 = vsub.f32 %v155, %v1343
    %v1345 = vand.u32 %v1344, 4294901760
    %1346 = vmatpush1.msra.mxu0 %v1345
    %1347 = vmatprep.subr.mxu0 0.0
    %v1348 = vand.u32 %v154, 4294901760
    %v1349 = vsub.f32 %v154, %v1348
    %v1350 = vand.u32 %v1349, 4294901760
    %1351 = vmatpush1.msra.mxu0 %v1350
    %1352 = vmatprep.subr.mxu0 0.0
    %v1353 = vand.u32 %v153, 4294901760
    %v1354 = vsub.f32 %v153, %v1353
    %v1355 = vand.u32 %v1354, 4294901760
    %1356 = vmatpush1.msra.mxu0 %v1355
    %1357 = vmatprep.subr.mxu0 0.0
    %v1358 = vand.u32 %v152, 4294901760
    %v1359 = vsub.f32 %v152, %v1358
    %v1360 = vand.u32 %v1359, 4294901760
    %1361 = vmatpush1.msra.mxu0 %v1360
    %1362 = vmatprep.subr.mxu0 0.0
    %v1363 = vand.u32 %v151, 4294901760
    %v1364 = vsub.f32 %v151, %v1363
    %v1365 = vand.u32 %v1364, 4294901760
    %1366 = vmatpush1.msra.mxu0 %v1365
    %1367 = vmatprep.subr.mxu0 0.0
    %v1368 = vand.u32 %v150, 4294901760
    %v1369 = vsub.f32 %v150, %v1368
    %v1370 = vand.u32 %v1369, 4294901760
    %1371 = vmatpush1.msra.mxu0 %v1370
    %1372 = vmatprep.subr.mxu0 0.0
    %v1373 = vand.u32 %v149, 4294901760
    %v1374 = vsub.f32 %v149, %v1373
    %v1375 = vand.u32 %v1374, 4294901760
    %1376 = vmatpush1.msra.mxu0 %v1375
    %1377 = vmatprep.subr.mxu0 0.0
    %v1378 = vand.u32 %v148, 4294901760
    %v1379 = vsub.f32 %v148, %v1378
    %v1380 = vand.u32 %v1379, 4294901760
    %1381 = vmatpush1.msra.mxu0 %v1380
    %1382 = vmatprep.subr.mxu0 0.0
    %v1383 = vand.u32 %v147, 4294901760
    %v1384 = vsub.f32 %v147, %v1383
    %v1385 = vand.u32 %v1384, 4294901760
    %1386 = vmatpush1.msra.mxu0 %v1385
    %1387 = vmatprep.subr.mxu0 0.0
    %v1388 = vand.u32 %v146, 4294901760
    %v1389 = vsub.f32 %v146, %v1388
    %v1390 = vand.u32 %v1389, 4294901760
    %1391 = vmatpush1.msra.mxu0 %v1390
    %1392 = vmatprep.subr.mxu0 0.0
    %1393 = vmatpush2.msra.mxu0 0.0
    %1394 = vmatprep.subr.mxu0 0.0
    %1395 = vmatpush2.msra.mxu0 0.0
    %1396 = vmatprep.subr.mxu0 0.0
    %1397 = vmatpush2.msra.mxu0 0.0
    %1398 = vmatprep.subr.mxu0 0.0
    %1399 = vmatpush2.msra.mxu0 0.0
    %1400 = vmatprep.subr.mxu0 0.0
    %1401 = vmatpush2.msra.mxu0 0.0
    %1402 = vmatprep.subr.mxu0 0.0
    %1403 = vmatpush2.msra.mxu0 0.0
    %1404 = vmatprep.subr.mxu0 0.0
    %1405 = vmatpush2.msra.mxu0 0.0
    %1406 = vmatprep.subr.mxu0 0.0
    %1407 = vmatpush2.msra.mxu0 0.0
    %1408 = vmatprep.subr.mxu0 0.0
    %1409 = vmatpush2.msra.mxu0 0.0
    %1410 = vmatprep.subr.mxu0 0.0
    %1411 = vmatpush2.msra.mxu0 0.0
    %1412 = vmatprep.subr.mxu0 0.0
    %1413 = vmatpush2.msra.mxu0 0.0
    %1414 = vmatprep.subr.mxu0 0.0
    %1415 = vmatpush2.msra.mxu0 0.0
    %1416 = vmatprep.subr.mxu0 0.0
    %1417 = vmatpush2.msra.mxu0 0.0
    %1418 = vmatprep.subr.mxu0 0.0
    %1419 = vmatpush2.msra.mxu0 0.0
    %1420 = vmatprep.subr.mxu0 0.0
    %1421 = vmatpush2.msra.mxu0 0.0
    %1422 = vmatprep.subr.mxu0 0.0
    %1423 = vmatpush2.msra.mxu0 0.0
    %1424 = vmatprep.mubr.f32.mxu0 0.0
    %v1425 = vand.u32 %v142, 4294901760
    %1426 = vmatmul.mubr.f32.gmra.mxu0 %v1425
    %v1427 = vpop.f32.mrf.mxu0
    %v1428 = vadd.f32 %v1301, %v1427
    %v1429 = vpop.f32.mrf.mxu0
    %1430 = vmatprep.mubr.f32.mxu0 0.0
    %v1431 = vand.u32 %v143, 4294901760
    %1432 = vmatmul.mubr.f32.gmra.mxu0 %v1431
    %v1433 = vpop.f32.mrf.mxu0
    %v1434 = vadd.f32 %v1309, %v1433
    %v1435 = vpop.f32.mrf.mxu0
    %1436 = vdwg.mxu0
    %1437 = vmatprep.subr.mxu0 0.0
    %v1438 = vand.u32 %v161, 4294901760
    %1439 = vmatpush1.msra.mxu0 %v1438
    %1440 = vmatprep.subr.mxu0 0.0
    %v1441 = vand.u32 %v160, 4294901760
    %1442 = vmatpush1.msra.mxu0 %v1441
    %1443 = vmatprep.subr.mxu0 0.0
    %v1444 = vand.u32 %v159, 4294901760
    %1445 = vmatpush1.msra.mxu0 %v1444
    %1446 = vmatprep.subr.mxu0 0.0
    %v1447 = vand.u32 %v158, 4294901760
    %1448 = vmatpush1.msra.mxu0 %v1447
    %1449 = vmatprep.subr.mxu0 0.0
    %v1450 = vand.u32 %v157, 4294901760
    %1451 = vmatpush1.msra.mxu0 %v1450
    %1452 = vmatprep.subr.mxu0 0.0
    %v1453 = vand.u32 %v156, 4294901760
    %1454 = vmatpush1.msra.mxu0 %v1453
    %1455 = vmatprep.subr.mxu0 0.0
    %v1456 = vand.u32 %v155, 4294901760
    %1457 = vmatpush1.msra.mxu0 %v1456
    %1458 = vmatprep.subr.mxu0 0.0
    %v1459 = vand.u32 %v154, 4294901760
    %1460 = vmatpush1.msra.mxu0 %v1459
    %1461 = vmatprep.subr.mxu0 0.0
    %v1462 = vand.u32 %v153, 4294901760
    %1463 = vmatpush1.msra.mxu0 %v1462
    %1464 = vmatprep.subr.mxu0 0.0
    %v1465 = vand.u32 %v152, 4294901760
    %1466 = vmatpush1.msra.mxu0 %v1465
    %1467 = vmatprep.subr.mxu0 0.0
    %v1468 = vand.u32 %v151, 4294901760
    %1469 = vmatpush1.msra.mxu0 %v1468
    %1470 = vmatprep.subr.mxu0 0.0
    %v1471 = vand.u32 %v150, 4294901760
    %1472 = vmatpush1.msra.mxu0 %v1471
    %1473 = vmatprep.subr.mxu0 0.0
    %v1474 = vand.u32 %v149, 4294901760
    %1475 = vmatpush1.msra.mxu0 %v1474
    %1476 = vmatprep.subr.mxu0 0.0
    %v1477 = vand.u32 %v148, 4294901760
    %1478 = vmatpush1.msra.mxu0 %v1477
    %1479 = vmatprep.subr.mxu0 0.0
    %v1480 = vand.u32 %v147, 4294901760
    %1481 = vmatpush1.msra.mxu0 %v1480
    %1482 = vmatprep.subr.mxu0 0.0
    %v1483 = vand.u32 %v146, 4294901760
    %1484 = vmatpush1.msra.mxu0 %v1483
    %1485 = vmatprep.subr.mxu0 0.0
    %1486 = vmatpush2.msra.mxu0 0.0
    %1487 = vmatprep.subr.mxu0 0.0
    %1488 = vmatpush2.msra.mxu0 0.0
    %1489 = vmatprep.subr.mxu0 0.0
    %1490 = vmatpush2.msra.mxu0 0.0
    %1491 = vmatprep.subr.mxu0 0.0
    %1492 = vmatpush2.msra.mxu0 0.0
    %1493 = vmatprep.subr.mxu0 0.0
    %1494 = vmatpush2.msra.mxu0 0.0
    %1495 = vmatprep.subr.mxu0 0.0
    %1496 = vmatpush2.msra.mxu0 0.0
    %1497 = vmatprep.subr.mxu0 0.0
    %1498 = vmatpush2.msra.mxu0 0.0
    %1499 = vmatprep.subr.mxu0 0.0
    %1500 = vmatpush2.msra.mxu0 0.0
    %1501 = vmatprep.subr.mxu0 0.0
    %1502 = vmatpush2.msra.mxu0 0.0
    %1503 = vmatprep.subr.mxu0 0.0
    %1504 = vmatpush2.msra.mxu0 0.0
    %1505 = vmatprep.subr.mxu0 0.0
    %1506 = vmatpush2.msra.mxu0 0.0
    %1507 = vmatprep.subr.mxu0 0.0
    %1508 = vmatpush2.msra.mxu0 0.0
    %1509 = vmatprep.subr.mxu0 0.0
    %1510 = vmatpush2.msra.mxu0 0.0
    %1511 = vmatprep.subr.mxu0 0.0
    %1512 = vmatpush2.msra.mxu0 0.0
    %1513 = vmatprep.subr.mxu0 0.0
    %1514 = vmatpush2.msra.mxu0 0.0
    %1515 = vmatprep.subr.mxu0 0.0
    %1516 = vmatpush2.msra.mxu0 0.0
    %1517 = vmatprep.mubr.f32.mxu0 0.0
    %v1518 = vand.u32 %v142, 4294901760
    %1519 = vmatmul.mubr.f32.gmra.mxu0 %v1518
    %v1520 = vpop.f32.mrf.mxu0
    %v1521 = vadd.f32 %v1428, %v1520
    %v1522 = vpop.f32.mrf.mxu0
    %1523 = vmatprep.mubr.f32.mxu0 0.0
    %v1524 = vand.u32 %v143, 4294901760
    %1525 = vmatmul.mubr.f32.gmra.mxu0 %v1524
    %v1526 = vpop.f32.mrf.mxu0
    %v1527 = vadd.f32 %v1434, %v1526
    %v1528 = vpop.f32.mrf.mxu0
    %1529 = vdwg.mxu0
    %v1530 = vrcp.pop %v1521
    %v1531 = vmul.f32 %v837, %v1530
    %v1532 = vrcp.pop %v1527
    %v1533 = vmul.f32 %v843, %v1532
    %v1534 = vsub.f32 1.0, %v1531
    %v1535 = vsub.f32 1.0, %v1533
    %v1536 = vmax.f32 %v1534, 0.0
    %v1537 = vmax.f32 %v1535, 0.0
    %v1538 = vsel %vm130, 1, 0
    %v1539 = vsel %vm131, 1, 0
    %vm1540 = vcmp.eq.s32.totalorder %v1538, 1
    %vm1541 = vcmp.eq.s32.totalorder %v1539, 1
    %v1542 = vsel %vm1540, %v1536, 0.0
    %v1543 = vsel %vm1541, %v1537, 0.0
    %1544 = vadd.xlane.f32.xlu0 %v142
    %v1545 = vpop.xlane.xlu0 %1544
    %1546 = vadd.xlane.f32.xlu0 %v143
    %v1547 = vpop.xlane.xlu0 %1546
    %v1548 = vsel %vm130, %v1545, 0.0
    %v1549 = vsel %vm131, %v1547, 0.0
    %s1550 = sld [smem:[#allocation2]]
    %vm1551 = vcmask 64512
    %v1552 = vsel %vm1551, %v1542, 0.0
    %v1553 = vsel %vm1551, %v1543, 0.0
    %v1554 = vadd.f32 %v1552, %v1553
    %1555 = vadd.xlane.f32.xlu0 %v1554
    %v1556 = vpop.xlane.xlu0 %1555
    %v1557 = vrot.slane %v1556, 4
    %v1558 = vadd.f32 %v1556, %v1557
    %v1559 = vrot.slane %v1558, 2
    %v1560 = vadd.f32 %v1558, %v1559
    %v1561 = vrot.slane %v1560, 1
    %v1562 = vadd.f32 %v1560, %v1561
    %s1563 = vtos %v1562
    %s1564 = sadd.f32 %s1550, %s1563
    %s1565 = scalar_lea.smem [#allocation2], 0
    %1566 = sst [smem:[%s1565]] %s1564
    %s1567 = sld [smem:[#allocation2 + $0x1]]
    %vm1568 = vcmask 7168
    %v1569 = vsel %vm1568, %v1548, 0.0
    %v1570 = vsel %vm1568, %v1549, 0.0
    %v1571 = vadd.f32 %v1569, %v1570
    %1572 = vadd.xlane.f32.xlu0 %v1571
    %v1573 = vpop.xlane.xlu0 %1572
    %v1574 = vrot.slane %v1573, 4
    %v1575 = vadd.f32 %v1573, %v1574
    %v1576 = vrot.slane %v1575, 2
    %v1577 = vadd.f32 %v1575, %v1576
    %v1578 = vrot.slane %v1577, 1
    %v1579 = vadd.f32 %v1577, %v1578
    %s1580 = vtos %v1579
    %s1581 = sadd.f32 %s1567, %s1580
    %s1582 = scalar_lea.smem [#allocation2], 1
    %1583 = sst [smem:[%s1582]] %s1581
    // Predicated region
    $region22: #{net_forward.1} parent=1 // pred_check
      _
    $region23: #{net_forward.1} parent=1 // pred_check_branch
      %1585 = sbr.rel (0) target = $region25
    $region24: #{net_forward.1} parent=1 // pred_region
      %s1587 = ssub.s32 16, 16
      %1588 = vsyncadd [#allocation3], %s1587
      %s1590 = sshll.u32 %s4, 4
      %s1591 = int_to_ptr.vmem [resolvable:$true] %s1590
      %1593 = dma.smem_to_vmem [#allocation2], 16, %s1591, [#allocation3]
    $region25: #{net_forward.1} parent=1 // pred_fallthru
      _
    // Predicated region
    $region26: #{net_forward.1} parent=1 // pred_check
      _
    $region27: #{net_forward.1} parent=1 // pred_check_branch
      %1595 = sbr.rel (0) target = $region29
    $region28: #{net_forward.1} parent=1 // pred_region
      %1596 = dma.done [#allocation3], 16
    $region29: #{net_forward.1} parent=1 // pred_fallthru
      _
    %1597 = sfence
    %1598 = vsyncpa [#allocation3], 1

</llo_original>
